<compile_context>
chip_gen: v7x
topology: tpu7x:2x2x1
jax: 0.10.0
libtpu: 0.0.40
codegen_flags: <defaults>
</compile_context>

<pallas_src>
import functools

import jax
import jax.numpy as jnp
import numpy as np
from jax.experimental import pallas as pl
from jax.experimental.pallas import tpu as pltpu

MAXIMUM_LENGTH_OF_SENTENCE = 100

EMBED_DIM = 16          # embedding_dim == input_dim of the LSTM
HIDDEN = 32             # hidden_dim
VOCAB = 50              # vocab_size
TAGSET = 8              # tagset_size
BATCH = 2
SEQ = 8                 # length of the padded input `sentence`

_HIGH = jax.lax.Precision.HIGHEST


def lstm_tagger_kernel(x_ref, lens_ref, wih_ref, b_ref, whh_ref, wlinb_ref,
                       out_ref,
                       xg_ref, hs_ref,
                       *, T, B, H):
    """Fused bidirectional LSTM recurrence + output projection, all in VMEM.

    Gate layout (columns of the 8H-wide gate matrices, reordered host-side):
        [i_f | i_b | f_f | f_b | g_f | g_b | o_f | o_b], each H wide.
    The recurrent state is the fused (B, 2H) = [h_fwd | h_bwd].
    x_ref row r = (t, b) carries [x[t, b], x[T-1-t, b]] so one input-gate GEMM
    pairs forward step t with backward step T-1-t for the fused loop.
    """
    H2 = 2 * H                     # fused state width == per-gate block width

    whh = whh_ref[...]             # (2H, 8H) bf16 block-diagonal recurrent W

    # ---- hoisted input-gate GEMM: all T steps, both directions, one matmul ----
    xg_ref[...] = (jnp.dot(x_ref[...], wih_ref[...],
                           preferred_element_type=jnp.float32)
                   + b_ref[...])                                    # (T*B, 8H)

    # ---- packed-sequence masks hoisted out of the recurrence ------------------
    lane = jax.lax.broadcasted_iota(jnp.int32, (B, H2), 1)
    fwd_lane = lane < H                       # forward half of the fused state
    batch = jax.lax.broadcasted_iota(jnp.int32, (B, H2), 0)
    lens_vec = jnp.zeros((B, H2), jnp.int32)
    for bidx in range(B):                     # SMEM scalars -> per-row lengths
        lens_vec = jnp.where(batch == bidx, lens_ref[bidx], lens_vec)
    valid = [lens_vec > t for t in range(T)]                  # True iff t < len[b]
    upd = [jnp.logical_or(fwd_lane, valid[T - 1 - i]) for i in range(T)]

    h2 = jnp.zeros((B, H2), jnp.float32)
    c2 = jnp.zeros((B, H2), jnp.float32)

    # ---- single fused recurrence (fwd t=i, bwd t=T-1-i), fully unrolled -------
    # (If T is ever raised toward MAX_LEN=100, switch to lax.fori_loop with
    #  unroll=4..8 instead of a 100-step straight-line unroll.)
    for i in range(T):
        t_b = T - 1 - i
        gates = (xg_ref[pl.ds(i * B, B), :]
                 + jnp.dot(h2.astype(jnp.bfloat16), whh,
                           preferred_element_type=jnp.float32))     # (B, 8H)

        # gate columns: [ i | f | g | o ], each H2 wide. Activations run per
        # 128-lane half (vreg boundary): sigmoid on [i|f], sigmoid+tanh on
        # [g|o] -> 3 EUP passes per step instead of 4.
        left = gates[:, :2 * H2]               # [i | f]
        right = gates[:, 2 * H2:]              # [g | o]
        sg_if = jax.nn.sigmoid(left)
        sg_go = jax.nn.sigmoid(right)
        tg_go = jnp.tanh(right)
        i2 = sg_if[:, :H2]
        f2 = sg_if[:, H2:]
        g2 = tg_go[:, :H2]
        o2 = sg_go[:, H2:]

        c_new = f2 * c2 + i2 * g2
        h_new = o2 * jnp.tanh(c_new)

        # packed-sequence semantics: backward half stays frozen (at zero) until
        # t_b < len[b]; forward half always advances (its invalid outputs are
        # zero-masked at the store below). Only these two selects remain on the
        # serial h2/c2 chain.
        h2_next = jnp.where(upd[i], h_new, h2)
        c2 = jnp.where(upd[i], c_new, c2)

        # merged (T*B, 2H) hidden-state scratch: fwd half at row-block i (zero
        # where t >= len), bwd half at row-block T-1-i (already zero where
        # t_b >= len, via the frozen-at-zero state).
        hs_ref[pl.ds(i * B, B), pl.ds(0, H)] = jnp.where(
            valid[i][:, :H], h_new[:, :H], 0.0)
        hs_ref[pl.ds(t_b * B, B), pl.ds(H, H)] = h2_next[:, H:]

        h2 = h2_next

    # ---- hoisted output projection: single (T*B, 2H) @ (2H, TAGS) matmul ------
    wl = wlinb_ref[pl.ds(0, H2), :]            # (2H, TAGS)
    bl = wlinb_ref[pl.ds(H2, 1), :]            # (1, TAGS)
    out_ref[...] = (jnp.dot(hs_ref[...], wl,
                            preferred_element_type=jnp.float32) + bl)


def _gate_reorder_perm(H):
    """Column perm: PyTorch [i f g o]_fwd | [i f g o]_bwd ->
    [i_f i_b | f_f f_b | g_f g_b | o_f o_b]."""
    idx = []
    for g in range(4):
        idx.append(np.arange(g * H, (g + 1) * H))                  # fwd gate g
        idx.append(np.arange(4 * H + g * H, 4 * H + (g + 1) * H))  # bwd gate g
    return np.concatenate(idx)


def _prep_kernel_weights(p):
    """Block-diagonal fused gate weights with reordered columns (plain XLA).

    Matmul weights are shipped in bf16 (single-pass MXU on all generations);
    gate bias stays f32; [wlin; blin] are packed into one f32 input array.
    """
    H = p['w_hh_f'].shape[1]
    E = p['w_ih_f'].shape[1]
    perm = _gate_reorder_perm(H)

    wih = jnp.zeros((2 * E, 8 * H), jnp.float32)
    wih = wih.at[:E, :4 * H].set(p['w_ih_f'].T)       # x[t]     -> fwd gates
    wih = wih.at[E:, 4 * H:].set(p['w_ih_b'].T)       # x[T-1-t] -> bwd gates

    whh = jnp.zeros((2 * H, 8 * H), jnp.float32)
    whh = whh.at[:H, :4 * H].set(p['w_hh_f'].T)       # h_fwd -> fwd gates
    whh = whh.at[H:, 4 * H:].set(p['w_hh_b'].T)       # h_bwd -> bwd gates

    b = jnp.concatenate([p['b_ih_f'] + p['b_hh_f'],
                         p['b_ih_b'] + p['b_hh_b']])  # (8H,)

    wlinb = jnp.concatenate([p['w_lin'].T, p['b_lin'][None, :]],
                            axis=0).astype(jnp.float32)            # (2H+1, TAGS)

    return (wih[:, perm].astype(jnp.bfloat16),
            b[perm][None, :].astype(jnp.float32),
            whh[:, perm].astype(jnp.bfloat16),
            wlinb)


def lstm_tagger_forward(sentence, length, p):
    """Equivalent of LSTMTagger.forward(sentence, length)."""
    B, T = sentence.shape
    H = p['w_hh_f'].shape[1]
    E = p['w_ih_f'].shape[1]
    tags = p['w_lin'].shape[0]

    # Embedding lookup (gather) is plain-JAX glue.
    # TODO(synk): pack_padded_sequence bookkeeping is realized via length masks
    # inside the kernel rather than an actual packed layout.
    embeds = jnp.take(p['emb'], sentence, axis=0).astype(jnp.float32)  # (B,T,E)
    x_tm = jnp.transpose(embeds, (1, 0, 2))                            # (T,B,E)
    # Pair forward step t with backward step T-1-t so a single GEMM produces
    # the input-gate contributions for both directions of a fused iteration.
    x_cat = jnp.concatenate([x_tm, x_tm[::-1]], axis=-1)               # (T,B,2E)
    x2d = x_cat.reshape(T * B, 2 * E).astype(jnp.bfloat16)

    wih, b, whh, wlinb = _prep_kernel_weights(p)
    lens = length.astype(jnp.int32)                                    # (B,) SMEM

    kernel = functools.partial(lstm_tagger_kernel, T=T, B=B, H=H)
    out2d = pl.pallas_call(
        kernel,
        out_shape=jax.ShapeDtypeStruct((T * B, tags), jnp.float32),
        in_specs=[pl.BlockSpec(memory_space=pltpu.MemorySpace.VMEM),   # x2d
                  pl.BlockSpec(memory_space=pltpu.MemorySpace.SMEM),   # lengths
                  pl.BlockSpec(memory_space=pltpu.MemorySpace.VMEM),   # wih
                  pl.BlockSpec(memory_space=pltpu.MemorySpace.VMEM),   # gate bias
                  pl.BlockSpec(memory_space=pltpu.MemorySpace.VMEM),   # whh
                  pl.BlockSpec(memory_space=pltpu.MemorySpace.VMEM)],  # [wlin;blin]
        out_specs=pl.BlockSpec(memory_space=pltpu.MemorySpace.VMEM),
        scratch_shapes=[pltpu.VMEM((T * B, 8 * H), jnp.float32),   # input gates
                        pltpu.VMEM((T * B, 2 * H), jnp.float32)],  # [hf | hb]
    )(x2d, lens, wih, b, whh, wlinb)

    out_bt = jnp.transpose(out2d.reshape(T, B, tags), (1, 0, 2))       # (B,T,TAGS)
    # pad_packed_sequence(..., total_length=MAX_LEN) zero-pads the LSTM output;
    # the Linear maps those zeros to its bias -> pad with bias here (free in XLA).
    pad = jnp.broadcast_to(p['b_lin'],
                           (B, MAXIMUM_LENGTH_OF_SENTENCE - T, tags))
    return jnp.concatenate([out_bt, pad], axis=1)                      # (B,100,TAGS)


def reference_forward(sentence, length, p):
    """Pure-JAX reference with identical semantics (for validation)."""
    B, T = sentence.shape
    H = p['w_hh_f'].shape[1]
    embeds = jnp.take(p['emb'], sentence, axis=0).astype(jnp.float32)
    lens = length.astype(jnp.int32)[:, None]

    def cell(x_t, h, c, wih, whh, b):
        g = (jnp.dot(x_t, wih.T, precision=_HIGH)
             + jnp.dot(h, whh.T, precision=_HIGH) + b)
        i_g, f_g, g_g, o_g = jnp.split(g, 4, axis=-1)
        c_new = jax.nn.sigmoid(f_g) * c + jax.nn.sigmoid(i_g) * jnp.tanh(g_g)
        h_new = jax.nn.sigmoid(o_g) * jnp.tanh(c_new)
        return h_new, c_new

    h = c = jnp.zeros((B, H), jnp.float32)
    hf = []
    for t in range(T):
        h, c = cell(embeds[:, t], h, c, p['w_ih_f'], p['w_hh_f'],
                    p['b_ih_f'] + p['b_hh_f'])
        hf.append(jnp.where(t < lens, h, 0.0))
    hf = jnp.stack(hf, axis=1)

    h = c = jnp.zeros((B, H), jnp.float32)
    hb = [None] * T
    for t in range(T - 1, -1, -1):
        h_new, c_new = cell(embeds[:, t], h, c, p['w_ih_b'], p['w_hh_b'],
                            p['b_ih_b'] + p['b_hh_b'])
        m = t < lens
        h = jnp.where(m, h_new, h)
        c = jnp.where(m, c_new, c)
        hb[t] = jnp.where(m, h_new, 0.0)
    hb = jnp.stack(hb, axis=1)

    lstm_out = jnp.concatenate([hf, hb], axis=-1)              # (B, T, 2H)
    pad = jnp.zeros((B, MAXIMUM_LENGTH_OF_SENTENCE - T, 2 * H), jnp.float32)
    lstm_out = jnp.concatenate([lstm_out, pad], axis=1)        # (B, MAX_LEN, 2H)
    return jnp.dot(lstm_out, p['w_lin'].T, precision=_HIGH) + p['b_lin']


def init_params(key):
    ks = jax.random.split(key, 12)
    scale = 1.0 / np.sqrt(HIDDEN)

    def u(k, shape):
        return jax.random.uniform(k, shape, jnp.float32, -scale, scale)

    emb = 0.5 * jax.random.normal(ks[0], (VOCAB, EMBED_DIM), jnp.float32)
    emb = emb.at[0].set(0.0)                                   # padding_idx=0
    return dict(
        emb=emb,
        w_ih_f=u(ks[1], (4 * HIDDEN, EMBED_DIM)),
        w_hh_f=u(ks[2], (4 * HIDDEN, HIDDEN)),
        b_ih_f=u(ks[3], (4 * HIDDEN,)),
        b_hh_f=u(ks[4], (4 * HIDDEN,)),
        w_ih_b=u(ks[5], (4 * HIDDEN, EMBED_DIM)),
        w_hh_b=u(ks[6], (4 * HIDDEN, HIDDEN)),
        b_ih_b=u(ks[7], (4 * HIDDEN,)),
        b_hh_b=u(ks[8], (4 * HIDDEN,)),
        w_lin=u(ks[9], (TAGSET, 2 * HIDDEN)),
        b_lin=u(ks[10], (TAGSET,)),
    )


if __name__ == "__main__":
    key = jax.random.PRNGKey(0)
    k_params, k_tok = jax.random.split(key)
    params = init_params(k_params)

    # deterministic example batch: (B, T) token ids, per-sequence lengths
    lengths = jnp.array([SEQ, 5], dtype=jnp.int32)
    sentence = jax.random.randint(k_tok, (BATCH, SEQ), 1, VOCAB, dtype=jnp.int32)
    pos = jnp.arange(SEQ)[None, :]
    sentence = jnp.where(pos < lengths[:, None], sentence, 0)  # pad id = 0

    out = lstm_tagger_forward(sentence, lengths, params)
    out = jax.block_until_ready(out)

    ref = jax.block_until_ready(reference_forward(sentence, lengths, params))
    assert out.shape == (BATCH, MAXIMUM_LENGTH_OF_SENTENCE, TAGSET), out.shape
    # kernel is intentionally bf16-matmul class vs the f32-HIGHEST reference
    np.testing.assert_allclose(np.asarray(out), np.asarray(ref),
                               rtol=2e-2, atol=2e-2)
    print("KERNEL_OK")
</pallas_src>

<mosaic_0001>
module attributes {stable_mosaic.version = 11 : i64} {
  func.func @lstm_tagger_kernel(%arg0: memref<16x32xbf16, #tpu.memory_space<vmem>>, %arg1: memref<2xi32, #tpu.memory_space<smem>>, %arg2: memref<32x256xbf16, #tpu.memory_space<vmem>>, %arg3: memref<1x256xf32, #tpu.memory_space<vmem>>, %arg4: memref<64x256xbf16, #tpu.memory_space<vmem>>, %arg5: memref<65x8xf32, #tpu.memory_space<vmem>>, %arg6: memref<16x8xf32, #tpu.memory_space<vmem>>, %arg7: memref<16x256xf32, #tpu.memory_space<vmem>>, %arg8: memref<16x64xf32, #tpu.memory_space<vmem>>) attributes {dimension_semantics = [], scalar_prefetch = 0 : i64, scratch_operands = 2 : i64, tpu.core_type = #tpu.core_type<tc>} {
    %c0 = arith.constant 0 : index
    %c0_0 = arith.constant 0 : index
    %0 = vector.load %arg4[%c0, %c0_0] : memref<64x256xbf16, #tpu.memory_space<vmem>>, vector<64x256xbf16>
    %c0_1 = arith.constant 0 : index
    %c0_2 = arith.constant 0 : index
    %1 = vector.load %arg0[%c0_1, %c0_2] : memref<16x32xbf16, #tpu.memory_space<vmem>>, vector<16x32xbf16>
    %c0_3 = arith.constant 0 : index
    %c0_4 = arith.constant 0 : index
    %2 = vector.load %arg2[%c0_3, %c0_4] : memref<32x256xbf16, #tpu.memory_space<vmem>>, vector<32x256xbf16>
    %cst = arith.constant dense<0.000000e+00> : vector<16x256xf32>
    %3 = tpu.matmul %1, %2, %cst {dimension_numbers = #tpu.dot_dimension_numbers<[1], [0], [0], [1], [0, 0, 1, 1], [], []>} : vector<16x32xbf16>, vector<32x256xbf16>, vector<16x256xf32> -> vector<16x256xf32>
    %c0_5 = arith.constant 0 : index
    %c0_6 = arith.constant 0 : index
    %4 = vector.load %arg3[%c0_5, %c0_6] : memref<1x256xf32, #tpu.memory_space<vmem>>, vector<1x256xf32>
    %5 = vector.broadcast %4 : vector<1x256xf32> to vector<16x256xf32>
    %6 = arith.addf %3, %5 : vector<16x256xf32>
    %c0_7 = arith.constant 0 : index
    %c0_8 = arith.constant 0 : index
    %7 = vector.load %arg7[%c0_7, %c0_8] : memref<16x256xf32, #tpu.memory_space<vmem>>, vector<16x256xf32>
    tpu.vector_store %arg7[%c0_7, %c0_8], %6 {strides = array<i32>} : memref<16x256xf32, #tpu.memory_space<vmem>>, vector<16x256xf32>,
    %8 = tpu.iota {dimensions = array<i32: 1>} : vector<2x64xi32>
    %c32_i32 = arith.constant 32 : i32
    %9 = vector.broadcast %c32_i32 : i32 to vector<2x64xi32>
    %10 = arith.cmpi slt, %8, %9 : vector<2x64xi32>
    %11 = tpu.iota {dimensions = array<i32: 0>} : vector<2x64xi32>
    %c0_i32 = arith.constant 0 : i32
    %12 = vector.broadcast %c0_i32 : i32 to vector<2x64xi32>
    %c0_i32_9 = arith.constant 0 : i32
    %13 = vector.broadcast %c0_i32_9 : i32 to vector<2x64xi32>
    %14 = arith.cmpi eq, %11, %13 : vector<2x64xi32>
    %c0_10 = arith.constant 0 : index
    %15 = memref.load %arg1[%c0_10] : memref<2xi32, #tpu.memory_space<smem>>
    %16 = vector.broadcast %15 : i32 to vector<2x64xi32>
    %17 = arith.select %14, %16, %12 : vector<2x64xi1>, vector<2x64xi32>
    %c1_i32 = arith.constant 1 : i32
    %18 = vector.broadcast %c1_i32 : i32 to vector<2x64xi32>
    %19 = arith.cmpi eq, %11, %18 : vector<2x64xi32>
    %c1 = arith.constant 1 : index
    %20 = memref.load %arg1[%c1] : memref<2xi32, #tpu.memory_space<smem>>
    %21 = vector.broadcast %20 : i32 to vector<2x64xi32>
    %22 = arith.select %19, %21, %17 : vector<2x64xi1>, vector<2x64xi32>
    %c0_i32_11 = arith.constant 0 : i32
    %23 = vector.broadcast %c0_i32_11 : i32 to vector<2x64xi32>
    %24 = arith.cmpi sgt, %22, %23 : vector<2x64xi32>
    %c1_i32_12 = arith.constant 1 : i32
    %25 = vector.broadcast %c1_i32_12 : i32 to vector<2x64xi32>
    %26 = arith.cmpi sgt, %22, %25 : vector<2x64xi32>
    %c2_i32 = arith.constant 2 : i32
    %27 = vector.broadcast %c2_i32 : i32 to vector<2x64xi32>
    %28 = arith.cmpi sgt, %22, %27 : vector<2x64xi32>
    %c3_i32 = arith.constant 3 : i32
    %29 = vector.broadcast %c3_i32 : i32 to vector<2x64xi32>
    %30 = arith.cmpi sgt, %22, %29 : vector<2x64xi32>
    %c4_i32 = arith.constant 4 : i32
    %31 = vector.broadcast %c4_i32 : i32 to vector<2x64xi32>
    %32 = arith.cmpi sgt, %22, %31 : vector<2x64xi32>
    %c5_i32 = arith.constant 5 : i32
    %33 = vector.broadcast %c5_i32 : i32 to vector<2x64xi32>
    %34 = arith.cmpi sgt, %22, %33 : vector<2x64xi32>
    %c6_i32 = arith.constant 6 : i32
    %35 = vector.broadcast %c6_i32 : i32 to vector<2x64xi32>
    %36 = arith.cmpi sgt, %22, %35 : vector<2x64xi32>
    %c7_i32 = arith.constant 7 : i32
    %37 = vector.broadcast %c7_i32 : i32 to vector<2x64xi32>
    %38 = arith.cmpi sgt, %22, %37 : vector<2x64xi32>
    %39 = arith.ori %10, %38 : vector<2x64xi1>
    %40 = arith.ori %10, %36 : vector<2x64xi1>
    %41 = arith.ori %10, %34 : vector<2x64xi1>
    %42 = arith.ori %10, %32 : vector<2x64xi1>
    %43 = arith.ori %10, %30 : vector<2x64xi1>
    %44 = arith.ori %10, %28 : vector<2x64xi1>
    %45 = arith.ori %10, %26 : vector<2x64xi1>
    %46 = arith.ori %10, %24 : vector<2x64xi1>
    %cst_13 = arith.constant 0.000000e+00 : f32
    %47 = vector.broadcast %cst_13 : f32 to vector<2x64xf32>
    %cst_14 = arith.constant 0.000000e+00 : f32
    %48 = vector.broadcast %cst_14 : f32 to vector<2x64xf32>
    %c0_15 = arith.constant 0 : index
    %c0_16 = arith.constant 0 : index
    %49 = vector.load %arg7[%c0_15, %c0_16] : memref<16x256xf32, #tpu.memory_space<vmem>>, vector<2x256xf32>
    %50 = arith.truncf %47 : vector<2x64xf32> to vector<2x64xbf16>
    %cst_17 = arith.constant dense<0.000000e+00> : vector<2x256xf32>
    %51 = tpu.matmul %50, %0, %cst_17 {dimension_numbers = #tpu.dot_dimension_numbers<[1], [0], [0], [1], [0, 0, 1, 1], [], []>} : vector<2x64xbf16>, vector<64x256xbf16>, vector<2x256xf32> -> vector<2x256xf32>
    %52 = arith.addf %49, %51 : vector<2x256xf32>
    %53 = vector.extract_strided_slice %52 {offsets = [0, 0], sizes = [2, 128], strides = [1, 1]} : vector<2x256xf32> to vector<2x128xf32>
    %54 = vector.extract_strided_slice %52 {offsets = [0, 128], sizes = [2, 128], strides = [1, 1]} : vector<2x256xf32> to vector<2x128xf32>
    %55 = arith.negf %53 : vector<2x128xf32>
    %56 = math.exp %55 : vector<2x128xf32>
    %cst_18 = arith.constant 1.000000e+00 : f32
    %57 = vector.broadcast %cst_18 : f32 to vector<2x128xf32>
    %58 = arith.addf %57, %56 : vector<2x128xf32>
    %59 = arith.divf %57, %58 : vector<2x128xf32>
    %60 = arith.negf %54 : vector<2x128xf32>
    %61 = math.exp %60 : vector<2x128xf32>
    %cst_19 = arith.constant 1.000000e+00 : f32
    %62 = vector.broadcast %cst_19 : f32 to vector<2x128xf32>
    %63 = arith.addf %62, %61 : vector<2x128xf32>
    %64 = arith.divf %62, %63 : vector<2x128xf32>
    %65 = math.tanh %54 : vector<2x128xf32>
    %66 = vector.extract_strided_slice %59 {offsets = [0, 0], sizes = [2, 64], strides = [1, 1]} : vector<2x128xf32> to vector<2x64xf32>
    %67 = vector.extract_strided_slice %59 {offsets = [0, 64], sizes = [2, 64], strides = [1, 1]} : vector<2x128xf32> to vector<2x64xf32>
    %68 = vector.extract_strided_slice %65 {offsets = [0, 0], sizes = [2, 64], strides = [1, 1]} : vector<2x128xf32> to vector<2x64xf32>
    %69 = vector.extract_strided_slice %64 {offsets = [0, 64], sizes = [2, 64], strides = [1, 1]} : vector<2x128xf32> to vector<2x64xf32>
    %70 = arith.mulf %67, %48 : vector<2x64xf32>
    %71 = arith.mulf %66, %68 : vector<2x64xf32>
    %72 = arith.addf %70, %71 : vector<2x64xf32>
    %73 = math.tanh %72 : vector<2x64xf32>
    %74 = arith.mulf %69, %73 : vector<2x64xf32>
    %75 = arith.select %39, %74, %47 : vector<2x64xi1>, vector<2x64xf32>
    %76 = arith.select %39, %72, %48 : vector<2x64xi1>, vector<2x64xf32>
    %77 = vector.extract_strided_slice %24 {offsets = [0, 0], sizes = [2, 32], strides = [1, 1]} : vector<2x64xi1> to vector<2x32xi1>
    %78 = vector.extract_strided_slice %74 {offsets = [0, 0], sizes = [2, 32], strides = [1, 1]} : vector<2x64xf32> to vector<2x32xf32>
    %cst_20 = arith.constant 0.000000e+00 : f32
    %79 = vector.broadcast %cst_20 : f32 to vector<2x32xf32>
    %80 = arith.select %77, %78, %79 : vector<2x32xi1>, vector<2x32xf32>
    %c0_21 = arith.constant 0 : index
    %c0_22 = arith.constant 0 : index
    %81 = vector.load %arg8[%c0_21, %c0_22] : memref<16x64xf32, #tpu.memory_space<vmem>>, vector<2x32xf32>
    tpu.vector_store %arg8[%c0_21, %c0_22], %80 {strides = array<i32>} : memref<16x64xf32, #tpu.memory_space<vmem>>, vector<2x32xf32>,
    %82 = vector.extract_strided_slice %75 {offsets = [0, 32], sizes = [2, 32], strides = [1, 1]} : vector<2x64xf32> to vector<2x32xf32>
    %c14 = arith.constant 14 : index
    %c32 = arith.constant 32 : index
    %83 = vector.load %arg8[%c14, %c32] : memref<16x64xf32, #tpu.memory_space<vmem>>, vector<2x32xf32>
    tpu.vector_store %arg8[%c14, %c32], %82 {strides = array<i32>} : memref<16x64xf32, #tpu.memory_space<vmem>>, vector<2x32xf32>,
    %c2 = arith.constant 2 : index
    %c0_23 = arith.constant 0 : index
    %84 = vector.load %arg7[%c2, %c0_23] : memref<16x256xf32, #tpu.memory_space<vmem>>, vector<2x256xf32>
    %85 = arith.truncf %75 : vector<2x64xf32> to vector<2x64xbf16>
    %cst_24 = arith.constant dense<0.000000e+00> : vector<2x256xf32>
    %86 = tpu.matmul %85, %0, %cst_24 {dimension_numbers = #tpu.dot_dimension_numbers<[1], [0], [0], [1], [0, 0, 1, 1], [], []>} : vector<2x64xbf16>, vector<64x256xbf16>, vector<2x256xf32> -> vector<2x256xf32>
    %87 = arith.addf %84, %86 : vector<2x256xf32>
    %88 = vector.extract_strided_slice %87 {offsets = [0, 0], sizes = [2, 128], strides = [1, 1]} : vector<2x256xf32> to vector<2x128xf32>
    %89 = vector.extract_strided_slice %87 {offsets = [0, 128], sizes = [2, 128], strides = [1, 1]} : vector<2x256xf32> to vector<2x128xf32>
    %90 = arith.negf %88 : vector<2x128xf32>
    %91 = math.exp %90 : vector<2x128xf32>
    %cst_25 = arith.constant 1.000000e+00 : f32
    %92 = vector.broadcast %cst_25 : f32 to vector<2x128xf32>
    %93 = arith.addf %92, %91 : vector<2x128xf32>
    %94 = arith.divf %92, %93 : vector<2x128xf32>
    %95 = arith.negf %89 : vector<2x128xf32>
    %96 = math.exp %95 : vector<2x128xf32>
    %cst_26 = arith.constant 1.000000e+00 : f32
    %97 = vector.broadcast %cst_26 : f32 to vector<2x128xf32>
    %98 = arith.addf %97, %96 : vector<2x128xf32>
    %99 = arith.divf %97, %98 : vector<2x128xf32>
    %100 = math.tanh %89 : vector<2x128xf32>
    %101 = vector.extract_strided_slice %94 {offsets = [0, 0], sizes = [2, 64], strides = [1, 1]} : vector<2x128xf32> to vector<2x64xf32>
    %102 = vector.extract_strided_slice %94 {offsets = [0, 64], sizes = [2, 64], strides = [1, 1]} : vector<2x128xf32> to vector<2x64xf32>
    %103 = vector.extract_strided_slice %100 {offsets = [0, 0], sizes = [2, 64], strides = [1, 1]} : vector<2x128xf32> to vector<2x64xf32>
    %104 = vector.extract_strided_slice %99 {offsets = [0, 64], sizes = [2, 64], strides = [1, 1]} : vector<2x128xf32> to vector<2x64xf32>
    %105 = arith.mulf %102, %76 : vector<2x64xf32>
    %106 = arith.mulf %101, %103 : vector<2x64xf32>
    %107 = arith.addf %105, %106 : vector<2x64xf32>
    %108 = math.tanh %107 : vector<2x64xf32>
    %109 = arith.mulf %104, %108 : vector<2x64xf32>
    %110 = arith.select %40, %109, %75 : vector<2x64xi1>, vector<2x64xf32>
    %111 = arith.select %40, %107, %76 : vector<2x64xi1>, vector<2x64xf32>
    %112 = vector.extract_strided_slice %26 {offsets = [0, 0], sizes = [2, 32], strides = [1, 1]} : vector<2x64xi1> to vector<2x32xi1>
    %113 = vector.extract_strided_slice %109 {offsets = [0, 0], sizes = [2, 32], strides = [1, 1]} : vector<2x64xf32> to vector<2x32xf32>
    %cst_27 = arith.constant 0.000000e+00 : f32
    %114 = vector.broadcast %cst_27 : f32 to vector<2x32xf32>
    %115 = arith.select %112, %113, %114 : vector<2x32xi1>, vector<2x32xf32>
    %c2_28 = arith.constant 2 : index
    %c0_29 = arith.constant 0 : index
    %116 = vector.load %arg8[%c2_28, %c0_29] : memref<16x64xf32, #tpu.memory_space<vmem>>, vector<2x32xf32>
    tpu.vector_store %arg8[%c2_28, %c0_29], %115 {strides = array<i32>} : memref<16x64xf32, #tpu.memory_space<vmem>>, vector<2x32xf32>,
    %117 = vector.extract_strided_slice %110 {offsets = [0, 32], sizes = [2, 32], strides = [1, 1]} : vector<2x64xf32> to vector<2x32xf32>
    %c12 = arith.constant 12 : index
    %c32_30 = arith.constant 32 : index
    %118 = vector.load %arg8[%c12, %c32_30] : memref<16x64xf32, #tpu.memory_space<vmem>>, vector<2x32xf32>
    tpu.vector_store %arg8[%c12, %c32_30], %117 {strides = array<i32>} : memref<16x64xf32, #tpu.memory_space<vmem>>, vector<2x32xf32>,
    %c4 = arith.constant 4 : index
    %c0_31 = arith.constant 0 : index
    %119 = vector.load %arg7[%c4, %c0_31] : memref<16x256xf32, #tpu.memory_space<vmem>>, vector<2x256xf32>
    %120 = arith.truncf %110 : vector<2x64xf32> to vector<2x64xbf16>
    %cst_32 = arith.constant dense<0.000000e+00> : vector<2x256xf32>
    %121 = tpu.matmul %120, %0, %cst_32 {dimension_numbers = #tpu.dot_dimension_numbers<[1], [0], [0], [1], [0, 0, 1, 1], [], []>} : vector<2x64xbf16>, vector<64x256xbf16>, vector<2x256xf32> -> vector<2x256xf32>
    %122 = arith.addf %119, %121 : vector<2x256xf32>
    %123 = vector.extract_strided_slice %122 {offsets = [0, 0], sizes = [2, 128], strides = [1, 1]} : vector<2x256xf32> to vector<2x128xf32>
    %124 = vector.extract_strided_slice %122 {offsets = [0, 128], sizes = [2, 128], strides = [1, 1]} : vector<2x256xf32> to vector<2x128xf32>
    %125 = arith.negf %123 : vector<2x128xf32>
    %126 = math.exp %125 : vector<2x128xf32>
    %cst_33 = arith.constant 1.000000e+00 : f32
    %127 = vector.broadcast %cst_33 : f32 to vector<2x128xf32>
    %128 = arith.addf %127, %126 : vector<2x128xf32>
    %129 = arith.divf %127, %128 : vector<2x128xf32>
    %130 = arith.negf %124 : vector<2x128xf32>
    %131 = math.exp %130 : vector<2x128xf32>
    %cst_34 = arith.constant 1.000000e+00 : f32
    %132 = vector.broadcast %cst_34 : f32 to vector<2x128xf32>
    %133 = arith.addf %132, %131 : vector<2x128xf32>
    %134 = arith.divf %132, %133 : vector<2x128xf32>
    %135 = math.tanh %124 : vector<2x128xf32>
    %136 = vector.extract_strided_slice %129 {offsets = [0, 0], sizes = [2, 64], strides = [1, 1]} : vector<2x128xf32> to vector<2x64xf32>
    %137 = vector.extract_strided_slice %129 {offsets = [0, 64], sizes = [2, 64], strides = [1, 1]} : vector<2x128xf32> to vector<2x64xf32>
    %138 = vector.extract_strided_slice %135 {offsets = [0, 0], sizes = [2, 64], strides = [1, 1]} : vector<2x128xf32> to vector<2x64xf32>
    %139 = vector.extract_strided_slice %134 {offsets = [0, 64], sizes = [2, 64], strides = [1, 1]} : vector<2x128xf32> to vector<2x64xf32>
    %140 = arith.mulf %137, %111 : vector<2x64xf32>
    %141 = arith.mulf %136, %138 : vector<2x64xf32>
    %142 = arith.addf %140, %141 : vector<2x64xf32>
    %143 = math.tanh %142 : vector<2x64xf32>
    %144 = arith.mulf %139, %143 : vector<2x64xf32>
    %145 = arith.select %41, %144, %110 : vector<2x64xi1>, vector<2x64xf32>
    %146 = arith.select %41, %142, %111 : vector<2x64xi1>, vector<2x64xf32>
    %147 = vector.extract_strided_slice %28 {offsets = [0, 0], sizes = [2, 32], strides = [1, 1]} : vector<2x64xi1> to vector<2x32xi1>
    %148 = vector.extract_strided_slice %144 {offsets = [0, 0], sizes = [2, 32], strides = [1, 1]} : vector<2x64xf32> to vector<2x32xf32>
    %cst_35 = arith.constant 0.000000e+00 : f32
    %149 = vector.broadcast %cst_35 : f32 to vector<2x32xf32>
    %150 = arith.select %147, %148, %149 : vector<2x32xi1>, vector<2x32xf32>
    %c4_36 = arith.constant 4 : index
    %c0_37 = arith.constant 0 : index
    %151 = vector.load %arg8[%c4_36, %c0_37] : memref<16x64xf32, #tpu.memory_space<vmem>>, vector<2x32xf32>
    tpu.vector_store %arg8[%c4_36, %c0_37], %150 {strides = array<i32>} : memref<16x64xf32, #tpu.memory_space<vmem>>, vector<2x32xf32>,
    %152 = vector.extract_strided_slice %145 {offsets = [0, 32], sizes = [2, 32], strides = [1, 1]} : vector<2x64xf32> to vector<2x32xf32>
    %c10 = arith.constant 10 : index
    %c32_38 = arith.constant 32 : index
    %153 = vector.load %arg8[%c10, %c32_38] : memref<16x64xf32, #tpu.memory_space<vmem>>, vector<2x32xf32>
    tpu.vector_store %arg8[%c10, %c32_38], %152 {strides = array<i32>} : memref<16x64xf32, #tpu.memory_space<vmem>>, vector<2x32xf32>,
    %c6 = arith.constant 6 : index
    %c0_39 = arith.constant 0 : index
    %154 = vector.load %arg7[%c6, %c0_39] : memref<16x256xf32, #tpu.memory_space<vmem>>, vector<2x256xf32>
    %155 = arith.truncf %145 : vector<2x64xf32> to vector<2x64xbf16>
    %cst_40 = arith.constant dense<0.000000e+00> : vector<2x256xf32>
    %156 = tpu.matmul %155, %0, %cst_40 {dimension_numbers = #tpu.dot_dimension_numbers<[1], [0], [0], [1], [0, 0, 1, 1], [], []>} : vector<2x64xbf16>, vector<64x256xbf16>, vector<2x256xf32> -> vector<2x256xf32>
    %157 = arith.addf %154, %156 : vector<2x256xf32>
    %158 = vector.extract_strided_slice %157 {offsets = [0, 0], sizes = [2, 128], strides = [1, 1]} : vector<2x256xf32> to vector<2x128xf32>
    %159 = vector.extract_strided_slice %157 {offsets = [0, 128], sizes = [2, 128], strides = [1, 1]} : vector<2x256xf32> to vector<2x128xf32>
    %160 = arith.negf %158 : vector<2x128xf32>
    %161 = math.exp %160 : vector<2x128xf32>
    %cst_41 = arith.constant 1.000000e+00 : f32
    %162 = vector.broadcast %cst_41 : f32 to vector<2x128xf32>
    %163 = arith.addf %162, %161 : vector<2x128xf32>
    %164 = arith.divf %162, %163 : vector<2x128xf32>
    %165 = arith.negf %159 : vector<2x128xf32>
    %166 = math.exp %165 : vector<2x128xf32>
    %cst_42 = arith.constant 1.000000e+00 : f32
    %167 = vector.broadcast %cst_42 : f32 to vector<2x128xf32>
    %168 = arith.addf %167, %166 : vector<2x128xf32>
    %169 = arith.divf %167, %168 : vector<2x128xf32>
    %170 = math.tanh %159 : vector<2x128xf32>
    %171 = vector.extract_strided_slice %164 {offsets = [0, 0], sizes = [2, 64], strides = [1, 1]} : vector<2x128xf32> to vector<2x64xf32>
    %172 = vector.extract_strided_slice %164 {offsets = [0, 64], sizes = [2, 64], strides = [1, 1]} : vector<2x128xf32> to vector<2x64xf32>
    %173 = vector.extract_strided_slice %170 {offsets = [0, 0], sizes = [2, 64], strides = [1, 1]} : vector<2x128xf32> to vector<2x64xf32>
    %174 = vector.extract_strided_slice %169 {offsets = [0, 64], sizes = [2, 64], strides = [1, 1]} : vector<2x128xf32> to vector<2x64xf32>
    %175 = arith.mulf %172, %146 : vector<2x64xf32>
    %176 = arith.mulf %171, %173 : vector<2x64xf32>
    %177 = arith.addf %175, %176 : vector<2x64xf32>
    %178 = math.tanh %177 : vector<2x64xf32>
    %179 = arith.mulf %174, %178 : vector<2x64xf32>
    %180 = arith.select %42, %179, %145 : vector<2x64xi1>, vector<2x64xf32>
    %181 = arith.select %42, %177, %146 : vector<2x64xi1>, vector<2x64xf32>
    %182 = vector.extract_strided_slice %30 {offsets = [0, 0], sizes = [2, 32], strides = [1, 1]} : vector<2x64xi1> to vector<2x32xi1>
    %183 = vector.extract_strided_slice %179 {offsets = [0, 0], sizes = [2, 32], strides = [1, 1]} : vector<2x64xf32> to vector<2x32xf32>
    %cst_43 = arith.constant 0.000000e+00 : f32
    %184 = vector.broadcast %cst_43 : f32 to vector<2x32xf32>
    %185 = arith.select %182, %183, %184 : vector<2x32xi1>, vector<2x32xf32>
    %c6_44 = arith.constant 6 : index
    %c0_45 = arith.constant 0 : index
    %186 = vector.load %arg8[%c6_44, %c0_45] : memref<16x64xf32, #tpu.memory_space<vmem>>, vector<2x32xf32>
    tpu.vector_store %arg8[%c6_44, %c0_45], %185 {strides = array<i32>} : memref<16x64xf32, #tpu.memory_space<vmem>>, vector<2x32xf32>,
    %187 = vector.extract_strided_slice %180 {offsets = [0, 32], sizes = [2, 32], strides = [1, 1]} : vector<2x64xf32> to vector<2x32xf32>
    %c8 = arith.constant 8 : index
    %c32_46 = arith.constant 32 : index
    %188 = vector.load %arg8[%c8, %c32_46] : memref<16x64xf32, #tpu.memory_space<vmem>>, vector<2x32xf32>
    tpu.vector_store %arg8[%c8, %c32_46], %187 {strides = array<i32>} : memref<16x64xf32, #tpu.memory_space<vmem>>, vector<2x32xf32>,
    %c8_47 = arith.constant 8 : index
    %c0_48 = arith.constant 0 : index
    %189 = vector.load %arg7[%c8_47, %c0_48] : memref<16x256xf32, #tpu.memory_space<vmem>>, vector<2x256xf32>
    %190 = arith.truncf %180 : vector<2x64xf32> to vector<2x64xbf16>
    %cst_49 = arith.constant dense<0.000000e+00> : vector<2x256xf32>
    %191 = tpu.matmul %190, %0, %cst_49 {dimension_numbers = #tpu.dot_dimension_numbers<[1], [0], [0], [1], [0, 0, 1, 1], [], []>} : vector<2x64xbf16>, vector<64x256xbf16>, vector<2x256xf32> -> vector<2x256xf32>
    %192 = arith.addf %189, %191 : vector<2x256xf32>
    %193 = vector.extract_strided_slice %192 {offsets = [0, 0], sizes = [2, 128], strides = [1, 1]} : vector<2x256xf32> to vector<2x128xf32>
    %194 = vector.extract_strided_slice %192 {offsets = [0, 128], sizes = [2, 128], strides = [1, 1]} : vector<2x256xf32> to vector<2x128xf32>
    %195 = arith.negf %193 : vector<2x128xf32>
    %196 = math.exp %195 : vector<2x128xf32>
    %cst_50 = arith.constant 1.000000e+00 : f32
    %197 = vector.broadcast %cst_50 : f32 to vector<2x128xf32>
    %198 = arith.addf %197, %196 : vector<2x128xf32>
    %199 = arith.divf %197, %198 : vector<2x128xf32>
    %200 = arith.negf %194 : vector<2x128xf32>
    %201 = math.exp %200 : vector<2x128xf32>
    %cst_51 = arith.constant 1.000000e+00 : f32
    %202 = vector.broadcast %cst_51 : f32 to vector<2x128xf32>
    %203 = arith.addf %202, %201 : vector<2x128xf32>
    %204 = arith.divf %202, %203 : vector<2x128xf32>
    %205 = math.tanh %194 : vector<2x128xf32>
    %206 = vector.extract_strided_slice %199 {offsets = [0, 0], sizes = [2, 64], strides = [1, 1]} : vector<2x128xf32> to vector<2x64xf32>
    %207 = vector.extract_strided_slice %199 {offsets = [0, 64], sizes = [2, 64], strides = [1, 1]} : vector<2x128xf32> to vector<2x64xf32>
    %208 = vector.extract_strided_slice %205 {offsets = [0, 0], sizes = [2, 64], strides = [1, 1]} : vector<2x128xf32> to vector<2x64xf32>
    %209 = vector.extract_strided_slice %204 {offsets = [0, 64], sizes = [2, 64], strides = [1, 1]} : vector<2x128xf32> to vector<2x64xf32>
    %210 = arith.mulf %207, %181 : vector<2x64xf32>
    %211 = arith.mulf %206, %208 : vector<2x64xf32>
    %212 = arith.addf %210, %211 : vector<2x64xf32>
    %213 = math.tanh %212 : vector<2x64xf32>
    %214 = arith.mulf %209, %213 : vector<2x64xf32>
    %215 = arith.select %43, %214, %180 : vector<2x64xi1>, vector<2x64xf32>
    %216 = arith.select %43, %212, %181 : vector<2x64xi1>, vector<2x64xf32>
    %217 = vector.extract_strided_slice %32 {offsets = [0, 0], sizes = [2, 32], strides = [1, 1]} : vector<2x64xi1> to vector<2x32xi1>
    %218 = vector.extract_strided_slice %214 {offsets = [0, 0], sizes = [2, 32], strides = [1, 1]} : vector<2x64xf32> to vector<2x32xf32>
    %cst_52 = arith.constant 0.000000e+00 : f32
    %219 = vector.broadcast %cst_52 : f32 to vector<2x32xf32>
    %220 = arith.select %217, %218, %219 : vector<2x32xi1>, vector<2x32xf32>
    %c8_53 = arith.constant 8 : index
    %c0_54 = arith.constant 0 : index
    %221 = vector.load %arg8[%c8_53, %c0_54] : memref<16x64xf32, #tpu.memory_space<vmem>>, vector<2x32xf32>
    tpu.vector_store %arg8[%c8_53, %c0_54], %220 {strides = array<i32>} : memref<16x64xf32, #tpu.memory_space<vmem>>, vector<2x32xf32>,
    %222 = vector.extract_strided_slice %215 {offsets = [0, 32], sizes = [2, 32], strides = [1, 1]} : vector<2x64xf32> to vector<2x32xf32>
    %c6_55 = arith.constant 6 : index
    %c32_56 = arith.constant 32 : index
    %223 = vector.load %arg8[%c6_55, %c32_56] : memref<16x64xf32, #tpu.memory_space<vmem>>, vector<2x32xf32>
    tpu.vector_store %arg8[%c6_55, %c32_56], %222 {strides = array<i32>} : memref<16x64xf32, #tpu.memory_space<vmem>>, vector<2x32xf32>,
    %c10_57 = arith.constant 10 : index
    %c0_58 = arith.constant 0 : index
    %224 = vector.load %arg7[%c10_57, %c0_58] : memref<16x256xf32, #tpu.memory_space<vmem>>, vector<2x256xf32>
    %225 = arith.truncf %215 : vector<2x64xf32> to vector<2x64xbf16>
    %cst_59 = arith.constant dense<0.000000e+00> : vector<2x256xf32>
    %226 = tpu.matmul %225, %0, %cst_59 {dimension_numbers = #tpu.dot_dimension_numbers<[1], [0], [0], [1], [0, 0, 1, 1], [], []>} : vector<2x64xbf16>, vector<64x256xbf16>, vector<2x256xf32> -> vector<2x256xf32>
    %227 = arith.addf %224, %226 : vector<2x256xf32>
    %228 = vector.extract_strided_slice %227 {offsets = [0, 0], sizes = [2, 128], strides = [1, 1]} : vector<2x256xf32> to vector<2x128xf32>
    %229 = vector.extract_strided_slice %227 {offsets = [0, 128], sizes = [2, 128], strides = [1, 1]} : vector<2x256xf32> to vector<2x128xf32>
    %230 = arith.negf %228 : vector<2x128xf32>
    %231 = math.exp %230 : vector<2x128xf32>
    %cst_60 = arith.constant 1.000000e+00 : f32
    %232 = vector.broadcast %cst_60 : f32 to vector<2x128xf32>
    %233 = arith.addf %232, %231 : vector<2x128xf32>
    %234 = arith.divf %232, %233 : vector<2x128xf32>
    %235 = arith.negf %229 : vector<2x128xf32>
    %236 = math.exp %235 : vector<2x128xf32>
    %cst_61 = arith.constant 1.000000e+00 : f32
    %237 = vector.broadcast %cst_61 : f32 to vector<2x128xf32>
    %238 = arith.addf %237, %236 : vector<2x128xf32>
    %239 = arith.divf %237, %238 : vector<2x128xf32>
    %240 = math.tanh %229 : vector<2x128xf32>
    %241 = vector.extract_strided_slice %234 {offsets = [0, 0], sizes = [2, 64], strides = [1, 1]} : vector<2x128xf32> to vector<2x64xf32>
    %242 = vector.extract_strided_slice %234 {offsets = [0, 64], sizes = [2, 64], strides = [1, 1]} : vector<2x128xf32> to vector<2x64xf32>
    %243 = vector.extract_strided_slice %240 {offsets = [0, 0], sizes = [2, 64], strides = [1, 1]} : vector<2x128xf32> to vector<2x64xf32>
    %244 = vector.extract_strided_slice %239 {offsets = [0, 64], sizes = [2, 64], strides = [1, 1]} : vector<2x128xf32> to vector<2x64xf32>
    %245 = arith.mulf %242, %216 : vector<2x64xf32>
    %246 = arith.mulf %241, %243 : vector<2x64xf32>
    %247 = arith.addf %245, %246 : vector<2x64xf32>
    %248 = math.tanh %247 : vector<2x64xf32>
    %249 = arith.mulf %244, %248 : vector<2x64xf32>
    %250 = arith.select %44, %249, %215 : vector<2x64xi1>, vector<2x64xf32>
    %251 = arith.select %44, %247, %216 : vector<2x64xi1>, vector<2x64xf32>
    %252 = vector.extract_strided_slice %34 {offsets = [0, 0], sizes = [2, 32], strides = [1, 1]} : vector<2x64xi1> to vector<2x32xi1>
    %253 = vector.extract_strided_slice %249 {offsets = [0, 0], sizes = [2, 32], strides = [1, 1]} : vector<2x64xf32> to vector<2x32xf32>
    %cst_62 = arith.constant 0.000000e+00 : f32
    %254 = vector.broadcast %cst_62 : f32 to vector<2x32xf32>
    %255 = arith.select %252, %253, %254 : vector<2x32xi1>, vector<2x32xf32>
    %c10_63 = arith.constant 10 : index
    %c0_64 = arith.constant 0 : index
    %256 = vector.load %arg8[%c10_63, %c0_64] : memref<16x64xf32, #tpu.memory_space<vmem>>, vector<2x32xf32>
    tpu.vector_store %arg8[%c10_63, %c0_64], %255 {strides = array<i32>} : memref<16x64xf32, #tpu.memory_space<vmem>>, vector<2x32xf32>,
    %257 = vector.extract_strided_slice %250 {offsets = [0, 32], sizes = [2, 32], strides = [1, 1]} : vector<2x64xf32> to vector<2x32xf32>
    %c4_65 = arith.constant 4 : index
    %c32_66 = arith.constant 32 : index
    %258 = vector.load %arg8[%c4_65, %c32_66] : memref<16x64xf32, #tpu.memory_space<vmem>>, vector<2x32xf32>
    tpu.vector_store %arg8[%c4_65, %c32_66], %257 {strides = array<i32>} : memref<16x64xf32, #tpu.memory_space<vmem>>, vector<2x32xf32>,
    %c12_67 = arith.constant 12 : index
    %c0_68 = arith.constant 0 : index
    %259 = vector.load %arg7[%c12_67, %c0_68] : memref<16x256xf32, #tpu.memory_space<vmem>>, vector<2x256xf32>
    %260 = arith.truncf %250 : vector<2x64xf32> to vector<2x64xbf16>
    %cst_69 = arith.constant dense<0.000000e+00> : vector<2x256xf32>
    %261 = tpu.matmul %260, %0, %cst_69 {dimension_numbers = #tpu.dot_dimension_numbers<[1], [0], [0], [1], [0, 0, 1, 1], [], []>} : vector<2x64xbf16>, vector<64x256xbf16>, vector<2x256xf32> -> vector<2x256xf32>
    %262 = arith.addf %259, %261 : vector<2x256xf32>
    %263 = vector.extract_strided_slice %262 {offsets = [0, 0], sizes = [2, 128], strides = [1, 1]} : vector<2x256xf32> to vector<2x128xf32>
    %264 = vector.extract_strided_slice %262 {offsets = [0, 128], sizes = [2, 128], strides = [1, 1]} : vector<2x256xf32> to vector<2x128xf32>
    %265 = arith.negf %263 : vector<2x128xf32>
    %266 = math.exp %265 : vector<2x128xf32>
    %cst_70 = arith.constant 1.000000e+00 : f32
    %267 = vector.broadcast %cst_70 : f32 to vector<2x128xf32>
    %268 = arith.addf %267, %266 : vector<2x128xf32>
    %269 = arith.divf %267, %268 : vector<2x128xf32>
    %270 = arith.negf %264 : vector<2x128xf32>
    %271 = math.exp %270 : vector<2x128xf32>
    %cst_71 = arith.constant 1.000000e+00 : f32
    %272 = vector.broadcast %cst_71 : f32 to vector<2x128xf32>
    %273 = arith.addf %272, %271 : vector<2x128xf32>
    %274 = arith.divf %272, %273 : vector<2x128xf32>
    %275 = math.tanh %264 : vector<2x128xf32>
    %276 = vector.extract_strided_slice %269 {offsets = [0, 0], sizes = [2, 64], strides = [1, 1]} : vector<2x128xf32> to vector<2x64xf32>
    %277 = vector.extract_strided_slice %269 {offsets = [0, 64], sizes = [2, 64], strides = [1, 1]} : vector<2x128xf32> to vector<2x64xf32>
    %278 = vector.extract_strided_slice %275 {offsets = [0, 0], sizes = [2, 64], strides = [1, 1]} : vector<2x128xf32> to vector<2x64xf32>
    %279 = vector.extract_strided_slice %274 {offsets = [0, 64], sizes = [2, 64], strides = [1, 1]} : vector<2x128xf32> to vector<2x64xf32>
    %280 = arith.mulf %277, %251 : vector<2x64xf32>
    %281 = arith.mulf %276, %278 : vector<2x64xf32>
    %282 = arith.addf %280, %281 : vector<2x64xf32>
    %283 = math.tanh %282 : vector<2x64xf32>
    %284 = arith.mulf %279, %283 : vector<2x64xf32>
    %285 = arith.select %45, %284, %250 : vector<2x64xi1>, vector<2x64xf32>
    %286 = arith.select %45, %282, %251 : vector<2x64xi1>, vector<2x64xf32>
    %287 = vector.extract_strided_slice %36 {offsets = [0, 0], sizes = [2, 32], strides = [1, 1]} : vector<2x64xi1> to vector<2x32xi1>
    %288 = vector.extract_strided_slice %284 {offsets = [0, 0], sizes = [2, 32], strides = [1, 1]} : vector<2x64xf32> to vector<2x32xf32>
    %cst_72 = arith.constant 0.000000e+00 : f32
    %289 = vector.broadcast %cst_72 : f32 to vector<2x32xf32>
    %290 = arith.select %287, %288, %289 : vector<2x32xi1>, vector<2x32xf32>
    %c12_73 = arith.constant 12 : index
    %c0_74 = arith.constant 0 : index
    %291 = vector.load %arg8[%c12_73, %c0_74] : memref<16x64xf32, #tpu.memory_space<vmem>>, vector<2x32xf32>
    tpu.vector_store %arg8[%c12_73, %c0_74], %290 {strides = array<i32>} : memref<16x64xf32, #tpu.memory_space<vmem>>, vector<2x32xf32>,
    %292 = vector.extract_strided_slice %285 {offsets = [0, 32], sizes = [2, 32], strides = [1, 1]} : vector<2x64xf32> to vector<2x32xf32>
    %c2_75 = arith.constant 2 : index
    %c32_76 = arith.constant 32 : index
    %293 = vector.load %arg8[%c2_75, %c32_76] : memref<16x64xf32, #tpu.memory_space<vmem>>, vector<2x32xf32>
    tpu.vector_store %arg8[%c2_75, %c32_76], %292 {strides = array<i32>} : memref<16x64xf32, #tpu.memory_space<vmem>>, vector<2x32xf32>,
    %c14_77 = arith.constant 14 : index
    %c0_78 = arith.constant 0 : index
    %294 = vector.load %arg7[%c14_77, %c0_78] : memref<16x256xf32, #tpu.memory_space<vmem>>, vector<2x256xf32>
    %295 = arith.truncf %285 : vector<2x64xf32> to vector<2x64xbf16>
    %cst_79 = arith.constant dense<0.000000e+00> : vector<2x256xf32>
    %296 = tpu.matmul %295, %0, %cst_79 {dimension_numbers = #tpu.dot_dimension_numbers<[1], [0], [0], [1], [0, 0, 1, 1], [], []>} : vector<2x64xbf16>, vector<64x256xbf16>, vector<2x256xf32> -> vector<2x256xf32>
    %297 = arith.addf %294, %296 : vector<2x256xf32>
    %298 = vector.extract_strided_slice %297 {offsets = [0, 0], sizes = [2, 128], strides = [1, 1]} : vector<2x256xf32> to vector<2x128xf32>
    %299 = vector.extract_strided_slice %297 {offsets = [0, 128], sizes = [2, 128], strides = [1, 1]} : vector<2x256xf32> to vector<2x128xf32>
    %300 = arith.negf %298 : vector<2x128xf32>
    %301 = math.exp %300 : vector<2x128xf32>
    %cst_80 = arith.constant 1.000000e+00 : f32
    %302 = vector.broadcast %cst_80 : f32 to vector<2x128xf32>
    %303 = arith.addf %302, %301 : vector<2x128xf32>
    %304 = arith.divf %302, %303 : vector<2x128xf32>
    %305 = arith.negf %299 : vector<2x128xf32>
    %306 = math.exp %305 : vector<2x128xf32>
    %cst_81 = arith.constant 1.000000e+00 : f32
    %307 = vector.broadcast %cst_81 : f32 to vector<2x128xf32>
    %308 = arith.addf %307, %306 : vector<2x128xf32>
    %309 = arith.divf %307, %308 : vector<2x128xf32>
    %310 = math.tanh %299 : vector<2x128xf32>
    %311 = vector.extract_strided_slice %304 {offsets = [0, 0], sizes = [2, 64], strides = [1, 1]} : vector<2x128xf32> to vector<2x64xf32>
    %312 = vector.extract_strided_slice %304 {offsets = [0, 64], sizes = [2, 64], strides = [1, 1]} : vector<2x128xf32> to vector<2x64xf32>
    %313 = vector.extract_strided_slice %310 {offsets = [0, 0], sizes = [2, 64], strides = [1, 1]} : vector<2x128xf32> to vector<2x64xf32>
    %314 = vector.extract_strided_slice %309 {offsets = [0, 64], sizes = [2, 64], strides = [1, 1]} : vector<2x128xf32> to vector<2x64xf32>
    %315 = arith.mulf %312, %286 : vector<2x64xf32>
    %316 = arith.mulf %311, %313 : vector<2x64xf32>
    %317 = arith.addf %315, %316 : vector<2x64xf32>
    %318 = math.tanh %317 : vector<2x64xf32>
    %319 = arith.mulf %314, %318 : vector<2x64xf32>
    %320 = arith.select %46, %319, %285 : vector<2x64xi1>, vector<2x64xf32>
    %321 = vector.extract_strided_slice %38 {offsets = [0, 0], sizes = [2, 32], strides = [1, 1]} : vector<2x64xi1> to vector<2x32xi1>
    %322 = vector.extract_strided_slice %319 {offsets = [0, 0], sizes = [2, 32], strides = [1, 1]} : vector<2x64xf32> to vector<2x32xf32>
    %cst_82 = arith.constant 0.000000e+00 : f32
    %323 = vector.broadcast %cst_82 : f32 to vector<2x32xf32>
    %324 = arith.select %321, %322, %323 : vector<2x32xi1>, vector<2x32xf32>
    %c14_83 = arith.constant 14 : index
    %c0_84 = arith.constant 0 : index
    %325 = vector.load %arg8[%c14_83, %c0_84] : memref<16x64xf32, #tpu.memory_space<vmem>>, vector<2x32xf32>
    tpu.vector_store %arg8[%c14_83, %c0_84], %324 {strides = array<i32>} : memref<16x64xf32, #tpu.memory_space<vmem>>, vector<2x32xf32>,
    %326 = vector.extract_strided_slice %320 {offsets = [0, 32], sizes = [2, 32], strides = [1, 1]} : vector<2x64xf32> to vector<2x32xf32>
    %c0_85 = arith.constant 0 : index
    %c32_86 = arith.constant 32 : index
    %327 = vector.load %arg8[%c0_85, %c32_86] : memref<16x64xf32, #tpu.memory_space<vmem>>, vector<2x32xf32>
    tpu.vector_store %arg8[%c0_85, %c32_86], %326 {strides = array<i32>} : memref<16x64xf32, #tpu.memory_space<vmem>>, vector<2x32xf32>,
    %c0_87 = arith.constant 0 : index
    %c0_88 = arith.constant 0 : index
    %328 = vector.load %arg5[%c0_87, %c0_88] : memref<65x8xf32, #tpu.memory_space<vmem>>, vector<64x8xf32>
    %c64 = arith.constant 64 : index
    %c0_89 = arith.constant 0 : index
    %329 = vector.load %arg5[%c64, %c0_89] : memref<65x8xf32, #tpu.memory_space<vmem>>, vector<1x8xf32>
    %c0_90 = arith.constant 0 : index
    %c0_91 = arith.constant 0 : index
    %330 = vector.load %arg8[%c0_90, %c0_91] : memref<16x64xf32, #tpu.memory_space<vmem>>, vector<16x64xf32>
    %cst_92 = arith.constant dense<0.000000e+00> : vector<16x8xf32>
    %331 = tpu.matmul %330, %328, %cst_92 {dimension_numbers = #tpu.dot_dimension_numbers<[1], [0], [0], [1], [0, 0, 1, 1], [], []>} : vector<16x64xf32>, vector<64x8xf32>, vector<16x8xf32> -> vector<16x8xf32>
    %332 = vector.broadcast %329 : vector<1x8xf32> to vector<16x8xf32>
    %333 = arith.addf %331, %332 : vector<16x8xf32>
    %c0_93 = arith.constant 0 : index
    %c0_94 = arith.constant 0 : index
    %334 = vector.load %arg6[%c0_93, %c0_94] : memref<16x8xf32, #tpu.memory_space<vmem>>, vector<16x8xf32>
    tpu.vector_store %arg6[%c0_93, %c0_94], %333 {strides = array<i32>} : memref<16x8xf32, #tpu.memory_space<vmem>>, vector<16x8xf32>,
    return
  }
}

</mosaic_0001>

<llo_original>
// kernel: tpu_custom_call.1
$region0: #{tpu_custom_call.1}
  #allocation0 [shape = 'u32[]', space=smem, size = 0x4, offset = 0x4, fixed_abs, tag = 'smem constant byte address 0x4 - core index']
  #allocation1 [shape = 'u32[144,128]{1,0:T(1,128)}', space=vmem, size = 0x12000, scoped, tag = 'internal scratch']
  #allocation2 [shape = 'f32[16,256]{1,0:T(8,128)}', space=vmem, size = 0x4000, scoped, tag = 'scratch operand']
  #allocation3 [shape = 'f32[16,64]{1,0:T(8,128)}', space=vmem, size = 0x2000, scoped, tag = 'scratch operand']
  %s0 = inlined_call_operand.vmem [shape: bf16[16,32], index: 0, kind: input, shape index: {}]
  %s1 = inlined_call_operand.vmem [shape: s32[2], index: 1, kind: input, shape index: {}]
  %s2 = inlined_call_operand.hbm [shape: bf16[32,256], index: 2, kind: input, shape index: {}]
  %s3 = inlined_call_operand.vmem [shape: f32[1,256], index: 3, kind: input, shape index: {}]
  %s4 = inlined_call_operand.vmem [shape: bf16[64,256], index: 4, kind: input, shape index: {}]
  %s5 = inlined_call_operand.vmem [shape: f32[65,8], index: 5, kind: input, shape index: {}]
  %s6 = inlined_call_operand.vmem [shape: f32[16,8], index: 6, kind: output, shape index: {}]
  %s7 = sld [smem:[#allocation0]]
  $region42: #{tpu_custom_call.1} parent=0
    _
  %s9 = ssub.s32 1, %s7
  %s10 = scalar_select 0, %s9, %s7
  $region1: #{tpu_custom_call.1} parent=0
    #allocation4 [shape = 'u8[512]{0}', space=smem, size = 0x200, scoped, tag = 'input window, operand 1, single buffered']
    #allocation5 [shape = 's32[1]{0}', space=sflag, size = 0x4, scoped, tag = 'scoped memory for tpu_custom_call.1']
    #allocation6 [shape = 's32[1]{0}', space=sflag, size = 0x4, scoped, tag = 'scoped memory for tpu_custom_call.1']
    #allocation7 [shape = 'u8[16384]{0}', space=vmem, size = 0x4000, scoped, tag = 'input window, operand 2, single buffered']
    %11 = vsyncpa [#allocation6], 0
    %12 = vsyncpa [#allocation5], 0
    // Predicated region
    $region2: #{tpu_custom_call.1} parent=1 // pred_check
      _
    $region3: #{tpu_custom_call.1} parent=1 // pred_check_branch
      %14 = sbr.rel (0) target = $region5
    $region4: #{tpu_custom_call.1} parent=1 // pred_region
      _
    $region5: #{tpu_custom_call.1} parent=1 // pred_fallthru
      _
    // Predicated region
    $region6: #{tpu_custom_call.1} parent=1 // pred_check
      _
    $region7: #{tpu_custom_call.1} parent=1 // pred_check_branch
      %16 = sbr.rel (0) target = $region9
    $region8: #{tpu_custom_call.1} parent=1 // pred_region
      %s18 = ssub.s32 16, 16
      %19 = vsyncadd [#allocation6], %s18
      %s21 = sshll.u32 %s1, 4
      %s22 = int_to_ptr.vmem [resolvable:$true] %s21
      %24 = dma.vmem_to_smem %s22, 16, [#allocation4], [#allocation6]
    $region9: #{tpu_custom_call.1} parent=1 // pred_fallthru
      _
    // Predicated region
    $region10: #{tpu_custom_call.1} parent=1 // pred_check
      _
    $region11: #{tpu_custom_call.1} parent=1 // pred_check_branch
      %26 = sbr.rel (0) target = $region13
    $region12: #{tpu_custom_call.1} parent=1 // pred_region
      %s28 = ssub.s32 512, 512
      %29 = vsyncadd [#allocation5], %s28
      %s30 = sshll.u32 [#allocation7], 4
      %s31 = int_to_ptr.vmem [resolvable:$true] %s30
      %36 = dma.hbm_to_vmem [thread:$0]  %s2, 512, %s31, [#allocation5], 128, 128, 8
    $region13: #{tpu_custom_call.1} parent=1 // pred_fallthru
      _
    // Predicated region
    $region14: #{tpu_custom_call.1} parent=1 // pred_check
      _
    $region15: #{tpu_custom_call.1} parent=1 // pred_check_branch
      %38 = sbr.rel (0) target = $region17
    $region16: #{tpu_custom_call.1} parent=1 // pred_region
      _
    $region17: #{tpu_custom_call.1} parent=1 // pred_fallthru
      _
    // Predicated region
    $region18: #{tpu_custom_call.1} parent=1 // pred_check
      _
    $region19: #{tpu_custom_call.1} parent=1 // pred_check_branch
      %40 = sbr.rel (0) target = $region21
    $region20: #{tpu_custom_call.1} parent=1 // pred_region
      _
    $region21: #{tpu_custom_call.1} parent=1 // pred_fallthru
      _
    // Predicated region
    $region22: #{tpu_custom_call.1} parent=1 // pred_check
      _
    $region23: #{tpu_custom_call.1} parent=1 // pred_check_branch
      %42 = sbr.rel (0) target = $region25
    $region24: #{tpu_custom_call.1} parent=1 // pred_region
      _
    $region25: #{tpu_custom_call.1} parent=1 // pred_fallthru
      _
    // Predicated region
    $region26: #{tpu_custom_call.1} parent=1 // pred_check
      _
    $region27: #{tpu_custom_call.1} parent=1 // pred_check_branch
      %44 = sbr.rel (0) target = $region29
    $region28: #{tpu_custom_call.1} parent=1 // pred_region
      %45 = dma.done [#allocation6], 16
    $region29: #{tpu_custom_call.1} parent=1 // pred_fallthru
      _
    // Predicated region
    $region30: #{tpu_custom_call.1} parent=1 // pred_check
      _
    $region31: #{tpu_custom_call.1} parent=1 // pred_check_branch
      %47 = sbr.rel (0) target = $region33
    $region32: #{tpu_custom_call.1} parent=1 // pred_region
      %48 = dma.done [#allocation5], 512
    $region33: #{tpu_custom_call.1} parent=1 // pred_fallthru
      _
    %49 = sfence
    %v51 = vld [vmem:[%s4] sm:$0xff]
    %v52 = vld [vmem:[%s4 + $0x8] sm:$0xff]
    %v53 = vld [vmem:[%s4 + $0x10] sm:$0xff]
    %v54 = vld [vmem:[%s4 + $0x18] sm:$0xff]
    %v55 = vld [vmem:[%s4 + $0x20] sm:$0xff]
    %v56 = vld [vmem:[%s4 + $0x28] sm:$0xff]
    %v57 = vld [vmem:[%s4 + $0x30] sm:$0xff]
    %v58 = vld [vmem:[%s4 + $0x38] sm:$0xff]
    %v59 = vld [vmem:[%s0] sm:$0xf]
    %v60 = vld [vmem:[%s0 + $0x4] sm:$0xf]
    %v61 = vld [vmem:[#allocation7] sm:$0xff]
    %v62 = vld [vmem:[#allocation7 + $0x8] sm:$0xff]
    %v63 = vld [vmem:[#allocation7 + $0x10] sm:$0xff]
    %v64 = vld [vmem:[#allocation7 + $0x18] sm:$0xff]
    %v65 = vld [vmem:[%s3] sm:$0x3]
    %v67 = vlaneseq
    %v68 = vshrl.u32 %v67, 7
    %v69 = vsub.s32 0, %v68
    %v70 = vrot.slane %v65, %v69
    %v71 = vlaneseq
    %v72 = vshrl.u32 %v71, 7
    %v73 = vsub.s32 1, %v72
    %v74 = vrot.slane %v65, %v73
    %v79 = vunpack.c.l.b16 %v59
    %v80 = vunpack.c.l.b16 %v60
    %v81 = vpack.c.b16 %v80, %v79
    %v86 = vunpack.c.l.b16 %v61
    %v87 = vunpack.c.h.b16 %v61
    %v88 = vunpack.c.l.b16 %v62
    %v89 = vunpack.c.h.b16 %v62
    %v90 = vunpack.c.l.b16 %v63
    %v91 = vunpack.c.h.b16 %v63
    %v92 = vunpack.c.l.b16 %v64
    %v93 = vunpack.c.h.b16 %v64
    %v94 = vpack.c.b16 %v88, %v86
    %v95 = vpack.c.b16 %v89, %v87
    %v96 = vpack.c.b16 %v92, %v90
    %v97 = vpack.c.b16 %v93, %v91
    %vm102 = vcmask 261120
    %v104 = vsel %vm102, %v81, 0
    %106 = vmatprep.subr.bf16.mxu0 %v95
    %107 = vmatpush1.bf16.msra.mxu0 %v94
    %108 = vmatprep.subr.bf16.mxu0 %v97
    %109 = vmatpush1.bf16.msra.mxu0 %v96
    %110 = vmatprep.subr.bf16.mxu0 0
    %111 = vmatpush1.bf16.msra.mxu0 0
    %112 = vmatprep.subr.bf16.mxu0 0
    %113 = vmatpush1.bf16.msra.mxu0 0
    %114 = vmatprep.subr.bf16.mxu0 0
    %115 = vmatpush1.bf16.msra.mxu0 0
    %116 = vmatprep.subr.bf16.mxu0 0
    %117 = vmatpush1.bf16.msra.mxu0 0
    %118 = vmatprep.subr.bf16.mxu0 0
    %119 = vmatpush1.bf16.msra.mxu0 0
    %120 = vmatprep.subr.bf16.mxu0 0
    %121 = vmatpush1.bf16.msra.mxu0 0
    %122 = vmatprep.subr.bf16.mxu0 0
    %123 = vmatpush1.bf16.msra.mxu0 0
    %124 = vmatprep.subr.bf16.mxu0 0
    %125 = vmatpush1.bf16.msra.mxu0 0
    %126 = vmatprep.subr.bf16.mxu0 0
    %127 = vmatpush1.bf16.msra.mxu0 0
    %128 = vmatprep.subr.bf16.mxu0 0
    %129 = vmatpush1.bf16.msra.mxu0 0
    %130 = vmatprep.subr.bf16.mxu0 0
    %131 = vmatpush1.bf16.msra.mxu0 0
    %132 = vmatprep.subr.bf16.mxu0 0
    %133 = vmatpush1.bf16.msra.mxu0 0
    %134 = vmatprep.subr.bf16.mxu0 0
    %135 = vmatpush1.bf16.msra.mxu0 0
    %136 = vmatprep.subr.bf16.mxu0 0
    %137 = vmatpush1.bf16.msra.mxu0 0
    %138 = vmatprep.mubr.bf16.mxu0 0
    %139 = vmatmul.mubr.bf16.gmra.mrb[0].mxu0 %v104
    %v140 = vpop.f32.mrb[0].mxu0
    %v141 = vadd.f32 %v70, %v140
    %v142 = vpop.f32.mrb[0].mxu0
    %v143 = vadd.f32 %v74, %v142
    %v144 = vpop.f32.mrb[0].mxu0
    %v145 = vadd.f32 %v70, %v144
    %v146 = vpop.f32.mrb[0].mxu0
    %v147 = vadd.f32 %v74, %v146
    %148 = vdwg.mxu0
    %149 = vst [vmem:[#allocation2] sm:$0xff] %v141
    %150 = vst [vmem:[#allocation2 + $0x8] sm:$0xff] %v143
    %151 = vst [vmem:[#allocation2 + $0x10] sm:$0xff] %v145
    %152 = vst [vmem:[#allocation2 + $0x18] sm:$0xff] %v147
    %v153 = vlaneseq
    %v154 = vand.u32 %v153, 127
    %vm155 = vcmp.lt.s32.totalorder %v154, 32
    %v156 = vlaneseq
    %v157 = vshrl.u32 %v156, 7
    %vm158 = vcmp.eq.s32.totalorder %v157, 0
    %s159 = sld [smem:[#allocation4]]
    %v160 = vstv %s159
    %v161 = vsel %vm158, %v160, 0
    %vm162 = vcmp.eq.s32.totalorder %v157, 1
    %s163 = sld [smem:[#allocation4 + $0x1]]
    %v164 = vstv %s163
    %v165 = vsel %vm162, %v164, %v161
    %vm166 = vcmp.gt.s32.totalorder %v165, 0
    %vm167 = vcmp.gt.s32.totalorder %v165, 1
    %vm168 = vcmp.gt.s32.totalorder %v165, 2
    %vm169 = vcmp.gt.s32.totalorder %v165, 3
    %vm170 = vcmp.gt.s32.totalorder %v165, 4
    %vm171 = vcmp.gt.s32.totalorder %v165, 5
    %vm172 = vcmp.gt.s32.totalorder %v165, 6
    %vm173 = vcmp.gt.s32.totalorder %v165, 7
    %vm174 = vmor %vm155, %vm173
    %vm175 = vmor %vm155, %vm172
    %vm176 = vmor %vm155, %vm171
    %vm177 = vmor %vm155, %vm170
    %vm178 = vmor %vm155, %vm169
    %vm179 = vmor %vm155, %vm168
    %vm180 = vmor %vm155, %vm167
    %vm181 = vmor %vm155, %vm166
    %v182 = vld [vmem:[#allocation2] sm:$0x3]
    %v183 = vld [vmem:[#allocation2 + $0x8] sm:$0x3]
    %v192 = vunpack.c.l.b16 %v51
    %v193 = vunpack.c.h.b16 %v51
    %v194 = vunpack.c.l.b16 %v52
    %v195 = vunpack.c.h.b16 %v52
    %v196 = vunpack.c.l.b16 %v53
    %v197 = vunpack.c.h.b16 %v53
    %v198 = vunpack.c.l.b16 %v54
    %v199 = vunpack.c.h.b16 %v54
    %v200 = vunpack.c.l.b16 %v55
    %v201 = vunpack.c.h.b16 %v55
    %v202 = vunpack.c.l.b16 %v56
    %v203 = vunpack.c.h.b16 %v56
    %v204 = vunpack.c.l.b16 %v57
    %v205 = vunpack.c.h.b16 %v57
    %v206 = vunpack.c.l.b16 %v58
    %v207 = vunpack.c.h.b16 %v58
    %v208 = vpack.c.b16 %v194, %v192
    %v209 = vpack.c.b16 %v195, %v193
    %v210 = vpack.c.b16 %v198, %v196
    %v211 = vpack.c.b16 %v199, %v197
    %v212 = vpack.c.b16 %v202, %v200
    %v213 = vpack.c.b16 %v203, %v201
    %v214 = vpack.c.b16 %v206, %v204
    %v215 = vpack.c.b16 %v207, %v205
    %vm224 = vcmask 523264
    %v226 = vsel %vm224, 0, 0
    %228 = vmatprep.subr.bf16.mxu0 %v209
    %229 = vmatpush1.bf16.msra.mxu0 %v208
    %230 = vmatprep.subr.bf16.mxu0 %v211
    %231 = vmatpush1.bf16.msra.mxu0 %v210
    %232 = vmatprep.subr.bf16.mxu0 %v213
    %233 = vmatpush1.bf16.msra.mxu0 %v212
    %234 = vmatprep.subr.bf16.mxu0 %v215
    %235 = vmatpush1.bf16.msra.mxu0 %v214
    %236 = vmatprep.subr.bf16.mxu0 0
    %237 = vmatpush1.bf16.msra.mxu0 0
    %238 = vmatprep.subr.bf16.mxu0 0
    %239 = vmatpush1.bf16.msra.mxu0 0
    %240 = vmatprep.subr.bf16.mxu0 0
    %241 = vmatpush1.bf16.msra.mxu0 0
    %242 = vmatprep.subr.bf16.mxu0 0
    %243 = vmatpush1.bf16.msra.mxu0 0
    %244 = vmatprep.subr.bf16.mxu0 0
    %245 = vmatpush1.bf16.msra.mxu0 0
    %246 = vmatprep.subr.bf16.mxu0 0
    %247 = vmatpush1.bf16.msra.mxu0 0
    %248 = vmatprep.subr.bf16.mxu0 0
    %249 = vmatpush1.bf16.msra.mxu0 0
    %250 = vmatprep.subr.bf16.mxu0 0
    %251 = vmatpush1.bf16.msra.mxu0 0
    %252 = vmatprep.subr.bf16.mxu0 0
    %253 = vmatpush1.bf16.msra.mxu0 0
    %254 = vmatprep.subr.bf16.mxu0 0
    %255 = vmatpush1.bf16.msra.mxu0 0
    %256 = vmatprep.subr.bf16.mxu0 0
    %257 = vmatpush1.bf16.msra.mxu0 0
    %258 = vmatprep.subr.bf16.mxu0 0
    %259 = vmatpush1.bf16.msra.mxu0 0
    %260 = vmatprep.mubr.bf16.mxu0 0
    %261 = vmatmul.mubr.bf16.gmra.mrb[0].mxu0 %v226
    %v262 = vpop.f32.mrb[0].mxu0
    %v263 = vadd.f32 0.0, %v262
    %v264 = vpop.f32.mrb[0].mxu0
    %v265 = vadd.f32 0.0, %v264
    %v266 = vpop.f32.mrb[0].mxu0
    %v267 = vpop.f32.mrb[0].mxu0
    %268 = vdwg.mxu0
    %v269 = vadd.f32 %v182, %v263
    %v270 = vadd.f32 %v183, %v265
    %v271 = vxor.u32 %v269, 2147483648
    %v272 = vmul.f32 %v271, 1.442695
    %v273 = vpow.pop %v272
    %v274 = vadd.f32 %v273, 1.0
    %v275 = vrcp.pop %v274
    %v276 = vmul.f32 1.0, %v275
    %v277 = vxor.u32 %v270, 2147483648
    %v278 = vmul.f32 %v277, 1.442695
    %v279 = vpow.pop %v278
    %v280 = vadd.f32 %v279, 1.0
    %v281 = vrcp.pop %v280
    %v282 = vmul.f32 1.0, %v281
    %v283 = vtanh.pop %v270
    %v284 = vmul.f32 %v276, 0.0
    %v285 = vmul.f32 %v276, %v283
    %287 = vrot.lane.b32.xlu0 %v285, 64
    %v288 = vpop.permute.xlu0 %287
    %v290 = vadd.f32 %v284, %v288
    %v291 = vtanh.pop %v290
    %v292 = vmul.f32 %v282, %v291
    %294 = vrot.lane.b32.xlu0 %v292, 64
    %v295 = vpop.permute.xlu0 %294
    %v297 = vsel %vm174, %v295, 0.0
    %299 = vrot.lane.b32.xlu0 %v290, 64
    %v300 = vpop.permute.xlu0 %299
    %v302 = vsel %vm174, %v300, 0.0
    %v303 = vsel %vm166, %v292, 0.0
    %305 = vrot.lane.b32.xlu0 %v303, 64
    %v306 = vpop.permute.xlu0 %305
    %vm308 = vcmask 254976
    %309 = vst.msk [vmem:[#allocation3] sm:$0x3] %vm308, %v306
    %vm310 = vcmask 517376
    %311 = vst.msk [vmem:[#allocation3 + $0xe] sm:$0x3] %vm310, %v297
    %v312 = vld [vmem:[#allocation2] sm:$0xc]
    %v313 = vld [vmem:[#allocation2 + $0x8] sm:$0xc]
    %v314 = vpack.c.bf16 %v297, %v297
    %v316 = vsel %vm224, %v314, 0
    %318 = vmatprep.subr.bf16.mxu0 %v209
    %319 = vmatpush1.bf16.msra.mxu0 %v208
    %320 = vmatprep.subr.bf16.mxu0 %v211
    %321 = vmatpush1.bf16.msra.mxu0 %v210
    %322 = vmatprep.subr.bf16.mxu0 %v213
    %323 = vmatpush1.bf16.msra.mxu0 %v212
    %324 = vmatprep.subr.bf16.mxu0 %v215
    %325 = vmatpush1.bf16.msra.mxu0 %v214
    %326 = vmatprep.subr.bf16.mxu0 0
    %327 = vmatpush1.bf16.msra.mxu0 0
    %328 = vmatprep.subr.bf16.mxu0 0
    %329 = vmatpush1.bf16.msra.mxu0 0
    %330 = vmatprep.subr.bf16.mxu0 0
    %331 = vmatpush1.bf16.msra.mxu0 0
    %332 = vmatprep.subr.bf16.mxu0 0
    %333 = vmatpush1.bf16.msra.mxu0 0
    %334 = vmatprep.subr.bf16.mxu0 0
    %335 = vmatpush1.bf16.msra.mxu0 0
    %336 = vmatprep.subr.bf16.mxu0 0
    %337 = vmatpush1.bf16.msra.mxu0 0
    %338 = vmatprep.subr.bf16.mxu0 0
    %339 = vmatpush1.bf16.msra.mxu0 0
    %340 = vmatprep.subr.bf16.mxu0 0
    %341 = vmatpush1.bf16.msra.mxu0 0
    %342 = vmatprep.subr.bf16.mxu0 0
    %343 = vmatpush1.bf16.msra.mxu0 0
    %344 = vmatprep.subr.bf16.mxu0 0
    %345 = vmatpush1.bf16.msra.mxu0 0
    %346 = vmatprep.subr.bf16.mxu0 0
    %347 = vmatpush1.bf16.msra.mxu0 0
    %348 = vmatprep.subr.bf16.mxu0 0
    %349 = vmatpush1.bf16.msra.mxu0 0
    %350 = vmatprep.mubr.bf16.mxu0 0
    %351 = vmatmul.mubr.bf16.gmra.mrb[0].mxu0 %v316
    %v352 = vpop.f32.mrb[0].mxu0
    %v353 = vadd.f32 0.0, %v352
    %v354 = vpop.f32.mrb[0].mxu0
    %v355 = vadd.f32 0.0, %v354
    %v356 = vpop.f32.mrb[0].mxu0
    %v357 = vpop.f32.mrb[0].mxu0
    %358 = vdwg.mxu0
    %v361 = vrot.slane %v353, 6
    %v362 = vrot.slane %v355, 6
    %v365 = vadd.f32 %v312, %v361
    %v366 = vadd.f32 %v313, %v362
    %v367 = vxor.u32 %v365, 2147483648
    %v368 = vmul.f32 %v367, 1.442695
    %v369 = vpow.pop %v368
    %v370 = vadd.f32 %v369, 1.0
    %v371 = vrcp.pop %v370
    %v372 = vmul.f32 1.0, %v371
    %v373 = vxor.u32 %v366, 2147483648
    %v374 = vmul.f32 %v373, 1.442695
    %v375 = vpow.pop %v374
    %v376 = vadd.f32 %v375, 1.0
    %v377 = vrcp.pop %v376
    %v378 = vmul.f32 1.0, %v377
    %v379 = vtanh.pop %v366
    %v381 = vrot.slane %v302, 6
    %382 = vrot.lane.b32.xlu0 %v381, 64
    %v383 = vpop.permute.xlu0 %382
    %v385 = vmul.f32 %v372, %v383
    %v386 = vmul.f32 %v372, %v379
    %388 = vrot.lane.b32.xlu0 %v386, 64
    %v389 = vpop.permute.xlu0 %388
    %v391 = vadd.f32 %v385, %v389
    %v392 = vtanh.pop %v391
    %v393 = vmul.f32 %v378, %v392
    %v395 = vrot.slane %v393, 2
    %396 = vrot.lane.b32.xlu0 %v395, 64
    %v397 = vpop.permute.xlu0 %396
    %v399 = vsel %vm175, %v397, %v297
    %v401 = vrot.slane %v391, 2
    %402 = vrot.lane.b32.xlu0 %v401, 64
    %v403 = vpop.permute.xlu0 %402
    %v405 = vsel %vm175, %v403, %v302
    %v406 = vsel %vm167, %v397, 0.0
    %407 = vst.msk [vmem:[#allocation3 + $0x2] sm:$0x3] %vm308, %v406
    %408 = vst.msk [vmem:[#allocation3 + $0xc] sm:$0x3] %vm310, %v399
    %v409 = vld [vmem:[#allocation2] sm:$0x30]
    %v410 = vld [vmem:[#allocation2 + $0x8] sm:$0x30]
    %v411 = vpack.c.bf16 %v399, %v399
    %v413 = vsel %vm224, %v411, 0
    %415 = vmatprep.subr.bf16.mxu0 %v209
    %416 = vmatpush1.bf16.msra.mxu0 %v208
    %417 = vmatprep.subr.bf16.mxu0 %v211
    %418 = vmatpush1.bf16.msra.mxu0 %v210
    %419 = vmatprep.subr.bf16.mxu0 %v213
    %420 = vmatpush1.bf16.msra.mxu0 %v212
    %421 = vmatprep.subr.bf16.mxu0 %v215
    %422 = vmatpush1.bf16.msra.mxu0 %v214
    %423 = vmatprep.subr.bf16.mxu0 0
    %424 = vmatpush1.bf16.msra.mxu0 0
    %425 = vmatprep.subr.bf16.mxu0 0
    %426 = vmatpush1.bf16.msra.mxu0 0
    %427 = vmatprep.subr.bf16.mxu0 0
    %428 = vmatpush1.bf16.msra.mxu0 0
    %429 = vmatprep.subr.bf16.mxu0 0
    %430 = vmatpush1.bf16.msra.mxu0 0
    %431 = vmatprep.subr.bf16.mxu0 0
    %432 = vmatpush1.bf16.msra.mxu0 0
    %433 = vmatprep.subr.bf16.mxu0 0
    %434 = vmatpush1.bf16.msra.mxu0 0
    %435 = vmatprep.subr.bf16.mxu0 0
    %436 = vmatpush1.bf16.msra.mxu0 0
    %437 = vmatprep.subr.bf16.mxu0 0
    %438 = vmatpush1.bf16.msra.mxu0 0
    %439 = vmatprep.subr.bf16.mxu0 0
    %440 = vmatpush1.bf16.msra.mxu0 0
    %441 = vmatprep.subr.bf16.mxu0 0
    %442 = vmatpush1.bf16.msra.mxu0 0
    %443 = vmatprep.subr.bf16.mxu0 0
    %444 = vmatpush1.bf16.msra.mxu0 0
    %445 = vmatprep.subr.bf16.mxu0 0
    %446 = vmatpush1.bf16.msra.mxu0 0
    %447 = vmatprep.mubr.bf16.mxu0 0
    %448 = vmatmul.mubr.bf16.gmra.mrb[0].mxu0 %v413
    %v449 = vpop.f32.mrb[0].mxu0
    %v450 = vadd.f32 0.0, %v449
    %v451 = vpop.f32.mrb[0].mxu0
    %v452 = vadd.f32 0.0, %v451
    %v453 = vpop.f32.mrb[0].mxu0
    %v454 = vpop.f32.mrb[0].mxu0
    %455 = vdwg.mxu0
    %v458 = vrot.slane %v450, 4
    %v459 = vrot.slane %v452, 4
    %v462 = vadd.f32 %v409, %v458
    %v463 = vadd.f32 %v410, %v459
    %v464 = vxor.u32 %v462, 2147483648
    %v465 = vmul.f32 %v464, 1.442695
    %v466 = vpow.pop %v465
    %v467 = vadd.f32 %v466, 1.0
    %v468 = vrcp.pop %v467
    %v469 = vmul.f32 1.0, %v468
    %v470 = vxor.u32 %v463, 2147483648
    %v471 = vmul.f32 %v470, 1.442695
    %v472 = vpow.pop %v471
    %v473 = vadd.f32 %v472, 1.0
    %v474 = vrcp.pop %v473
    %v475 = vmul.f32 1.0, %v474
    %v476 = vtanh.pop %v463
    %v478 = vrot.slane %v405, 4
    %479 = vrot.lane.b32.xlu0 %v478, 64
    %v480 = vpop.permute.xlu0 %479
    %v482 = vmul.f32 %v469, %v480
    %v483 = vmul.f32 %v469, %v476
    %485 = vrot.lane.b32.xlu0 %v483, 64
    %v486 = vpop.permute.xlu0 %485
    %v488 = vadd.f32 %v482, %v486
    %v489 = vtanh.pop %v488
    %v490 = vmul.f32 %v475, %v489
    %v492 = vrot.slane %v490, 4
    %493 = vrot.lane.b32.xlu0 %v492, 64
    %v494 = vpop.permute.xlu0 %493
    %v496 = vsel %vm176, %v494, %v399
    %v498 = vrot.slane %v488, 4
    %499 = vrot.lane.b32.xlu0 %v498, 64
    %v500 = vpop.permute.xlu0 %499
    %v502 = vsel %vm176, %v500, %v405
    %v503 = vsel %vm168, %v494, 0.0
    %504 = vst.msk [vmem:[#allocation3 + $0x4] sm:$0x3] %vm308, %v503
    %505 = vst.msk [vmem:[#allocation3 + $0xa] sm:$0x3] %vm310, %v496
    %v506 = vld [vmem:[#allocation2] sm:$0xc0]
    %v507 = vld [vmem:[#allocation2 + $0x8] sm:$0xc0]
    %v508 = vpack.c.bf16 %v496, %v496
    %v510 = vsel %vm224, %v508, 0
    %512 = vmatprep.subr.bf16.mxu0 %v209
    %513 = vmatpush1.bf16.msra.mxu0 %v208
    %514 = vmatprep.subr.bf16.mxu0 %v211
    %515 = vmatpush1.bf16.msra.mxu0 %v210
    %516 = vmatprep.subr.bf16.mxu0 %v213
    %517 = vmatpush1.bf16.msra.mxu0 %v212
    %518 = vmatprep.subr.bf16.mxu0 %v215
    %519 = vmatpush1.bf16.msra.mxu0 %v214
    %520 = vmatprep.subr.bf16.mxu0 0
    %521 = vmatpush1.bf16.msra.mxu0 0
    %522 = vmatprep.subr.bf16.mxu0 0
    %523 = vmatpush1.bf16.msra.mxu0 0
    %524 = vmatprep.subr.bf16.mxu0 0
    %525 = vmatpush1.bf16.msra.mxu0 0
    %526 = vmatprep.subr.bf16.mxu0 0
    %527 = vmatpush1.bf16.msra.mxu0 0
    %528 = vmatprep.subr.bf16.mxu0 0
    %529 = vmatpush1.bf16.msra.mxu0 0
    %530 = vmatprep.subr.bf16.mxu0 0
    %531 = vmatpush1.bf16.msra.mxu0 0
    %532 = vmatprep.subr.bf16.mxu0 0
    %533 = vmatpush1.bf16.msra.mxu0 0
    %534 = vmatprep.subr.bf16.mxu0 0
    %535 = vmatpush1.bf16.msra.mxu0 0
    %536 = vmatprep.subr.bf16.mxu0 0
    %537 = vmatpush1.bf16.msra.mxu0 0
    %538 = vmatprep.subr.bf16.mxu0 0
    %539 = vmatpush1.bf16.msra.mxu0 0
    %540 = vmatprep.subr.bf16.mxu0 0
    %541 = vmatpush1.bf16.msra.mxu0 0
    %542 = vmatprep.subr.bf16.mxu0 0
    %543 = vmatpush1.bf16.msra.mxu0 0
    %544 = vmatprep.mubr.bf16.mxu0 0
    %545 = vmatmul.mubr.bf16.gmra.mrb[0].mxu0 %v510
    %v546 = vpop.f32.mrb[0].mxu0
    %v547 = vadd.f32 0.0, %v546
    %v548 = vpop.f32.mrb[0].mxu0
    %v549 = vadd.f32 0.0, %v548
    %v550 = vpop.f32.mrb[0].mxu0
    %v551 = vpop.f32.mrb[0].mxu0
    %552 = vdwg.mxu0
    %v555 = vrot.slane %v547, 2
    %v556 = vrot.slane %v549, 2
    %v559 = vadd.f32 %v506, %v555
    %v560 = vadd.f32 %v507, %v556
    %v561 = vxor.u32 %v559, 2147483648
    %v562 = vmul.f32 %v561, 1.442695
    %v563 = vpow.pop %v562
    %v564 = vadd.f32 %v563, 1.0
    %v565 = vrcp.pop %v564
    %v566 = vmul.f32 1.0, %v565
    %v567 = vxor.u32 %v560, 2147483648
    %v568 = vmul.f32 %v567, 1.442695
    %v569 = vpow.pop %v568
    %v570 = vadd.f32 %v569, 1.0
    %v571 = vrcp.pop %v570
    %v572 = vmul.f32 1.0, %v571
    %v573 = vtanh.pop %v560
    %v575 = vrot.slane %v502, 2
    %576 = vrot.lane.b32.xlu0 %v575, 64
    %v577 = vpop.permute.xlu0 %576
    %v579 = vmul.f32 %v566, %v577
    %v580 = vmul.f32 %v566, %v573
    %582 = vrot.lane.b32.xlu0 %v580, 64
    %v583 = vpop.permute.xlu0 %582
    %v585 = vadd.f32 %v579, %v583
    %v586 = vtanh.pop %v585
    %v587 = vmul.f32 %v572, %v586
    %v589 = vrot.slane %v587, 6
    %590 = vrot.lane.b32.xlu0 %v589, 64
    %v591 = vpop.permute.xlu0 %590
    %v593 = vsel %vm177, %v591, %v496
    %v595 = vrot.slane %v585, 6
    %596 = vrot.lane.b32.xlu0 %v595, 64
    %v597 = vpop.permute.xlu0 %596
    %v599 = vsel %vm177, %v597, %v502
    %v600 = vsel %vm169, %v591, 0.0
    %601 = vst.msk [vmem:[#allocation3 + $0x6] sm:$0x3] %vm308, %v600
    %602 = vst.msk [vmem:[#allocation3 + $0x8] sm:$0x3] %vm310, %v593
    %v603 = vld [vmem:[#allocation2 + $0x10] sm:$0x3]
    %v604 = vld [vmem:[#allocation2 + $0x18] sm:$0x3]
    %v605 = vpack.c.bf16 %v593, %v593
    %v607 = vsel %vm224, %v605, 0
    %609 = vmatprep.subr.bf16.mxu0 %v209
    %610 = vmatpush1.bf16.msra.mxu0 %v208
    %611 = vmatprep.subr.bf16.mxu0 %v211
    %612 = vmatpush1.bf16.msra.mxu0 %v210
    %613 = vmatprep.subr.bf16.mxu0 %v213
    %614 = vmatpush1.bf16.msra.mxu0 %v212
    %615 = vmatprep.subr.bf16.mxu0 %v215
    %616 = vmatpush1.bf16.msra.mxu0 %v214
    %617 = vmatprep.subr.bf16.mxu0 0
    %618 = vmatpush1.bf16.msra.mxu0 0
    %619 = vmatprep.subr.bf16.mxu0 0
    %620 = vmatpush1.bf16.msra.mxu0 0
    %621 = vmatprep.subr.bf16.mxu0 0
    %622 = vmatpush1.bf16.msra.mxu0 0
    %623 = vmatprep.subr.bf16.mxu0 0
    %624 = vmatpush1.bf16.msra.mxu0 0
    %625 = vmatprep.subr.bf16.mxu0 0
    %626 = vmatpush1.bf16.msra.mxu0 0
    %627 = vmatprep.subr.bf16.mxu0 0
    %628 = vmatpush1.bf16.msra.mxu0 0
    %629 = vmatprep.subr.bf16.mxu0 0
    %630 = vmatpush1.bf16.msra.mxu0 0
    %631 = vmatprep.subr.bf16.mxu0 0
    %632 = vmatpush1.bf16.msra.mxu0 0
    %633 = vmatprep.subr.bf16.mxu0 0
    %634 = vmatpush1.bf16.msra.mxu0 0
    %635 = vmatprep.subr.bf16.mxu0 0
    %636 = vmatpush1.bf16.msra.mxu0 0
    %637 = vmatprep.subr.bf16.mxu0 0
    %638 = vmatpush1.bf16.msra.mxu0 0
    %639 = vmatprep.subr.bf16.mxu0 0
    %640 = vmatpush1.bf16.msra.mxu0 0
    %641 = vmatprep.mubr.bf16.mxu0 0
    %642 = vmatmul.mubr.bf16.gmra.mrb[0].mxu0 %v607
    %v643 = vpop.f32.mrb[0].mxu0
    %v644 = vadd.f32 0.0, %v643
    %v645 = vpop.f32.mrb[0].mxu0
    %v646 = vadd.f32 0.0, %v645
    %v647 = vpop.f32.mrb[0].mxu0
    %v648 = vpop.f32.mrb[0].mxu0
    %649 = vdwg.mxu0
    %v650 = vadd.f32 %v603, %v644
    %v651 = vadd.f32 %v604, %v646
    %v652 = vxor.u32 %v650, 2147483648
    %v653 = vmul.f32 %v652, 1.442695
    %v654 = vpow.pop %v653
    %v655 = vadd.f32 %v654, 1.0
    %v656 = vrcp.pop %v655
    %v657 = vmul.f32 1.0, %v656
    %v658 = vxor.u32 %v651, 2147483648
    %v659 = vmul.f32 %v658, 1.442695
    %v660 = vpow.pop %v659
    %v661 = vadd.f32 %v660, 1.0
    %v662 = vrcp.pop %v661
    %v663 = vmul.f32 1.0, %v662
    %v664 = vtanh.pop %v651
    %666 = vrot.lane.b32.xlu0 %v599, 64
    %v667 = vpop.permute.xlu0 %666
    %v669 = vmul.f32 %v657, %v667
    %v670 = vmul.f32 %v657, %v664
    %672 = vrot.lane.b32.xlu0 %v670, 64
    %v673 = vpop.permute.xlu0 %672
    %v675 = vadd.f32 %v669, %v673
    %v676 = vtanh.pop %v675
    %v677 = vmul.f32 %v663, %v676
    %679 = vrot.lane.b32.xlu0 %v677, 64
    %v680 = vpop.permute.xlu0 %679
    %v682 = vsel %vm178, %v680, %v593
    %684 = vrot.lane.b32.xlu0 %v675, 64
    %v685 = vpop.permute.xlu0 %684
    %v687 = vsel %vm178, %v685, %v599
    %v688 = vsel %vm170, %v677, 0.0
    %690 = vrot.lane.b32.xlu0 %v688, 64
    %v691 = vpop.permute.xlu0 %690
    %693 = vst.msk [vmem:[#allocation3 + $0x8] sm:$0x3] %vm308, %v691
    %694 = vst.msk [vmem:[#allocation3 + $0x6] sm:$0x3] %vm310, %v682
    %v695 = vld [vmem:[#allocation2 + $0x10] sm:$0xc]
    %v696 = vld [vmem:[#allocation2 + $0x18] sm:$0xc]
    %v697 = vpack.c.bf16 %v682, %v682
    %v699 = vsel %vm224, %v697, 0
    %701 = vmatprep.subr.bf16.mxu0 %v209
    %702 = vmatpush1.bf16.msra.mxu0 %v208
    %703 = vmatprep.subr.bf16.mxu0 %v211
    %704 = vmatpush1.bf16.msra.mxu0 %v210
    %705 = vmatprep.subr.bf16.mxu0 %v213
    %706 = vmatpush1.bf16.msra.mxu0 %v212
    %707 = vmatprep.subr.bf16.mxu0 %v215
    %708 = vmatpush1.bf16.msra.mxu0 %v214
    %709 = vmatprep.subr.bf16.mxu0 0
    %710 = vmatpush1.bf16.msra.mxu0 0
    %711 = vmatprep.subr.bf16.mxu0 0
    %712 = vmatpush1.bf16.msra.mxu0 0
    %713 = vmatprep.subr.bf16.mxu0 0
    %714 = vmatpush1.bf16.msra.mxu0 0
    %715 = vmatprep.subr.bf16.mxu0 0
    %716 = vmatpush1.bf16.msra.mxu0 0
    %717 = vmatprep.subr.bf16.mxu0 0
    %718 = vmatpush1.bf16.msra.mxu0 0
    %719 = vmatprep.subr.bf16.mxu0 0
    %720 = vmatpush1.bf16.msra.mxu0 0
    %721 = vmatprep.subr.bf16.mxu0 0
    %722 = vmatpush1.bf16.msra.mxu0 0
    %723 = vmatprep.subr.bf16.mxu0 0
    %724 = vmatpush1.bf16.msra.mxu0 0
    %725 = vmatprep.subr.bf16.mxu0 0
    %726 = vmatpush1.bf16.msra.mxu0 0
    %727 = vmatprep.subr.bf16.mxu0 0
    %728 = vmatpush1.bf16.msra.mxu0 0
    %729 = vmatprep.subr.bf16.mxu0 0
    %730 = vmatpush1.bf16.msra.mxu0 0
    %731 = vmatprep.subr.bf16.mxu0 0
    %732 = vmatpush1.bf16.msra.mxu0 0
    %733 = vmatprep.mubr.bf16.mxu0 0
    %734 = vmatmul.mubr.bf16.gmra.mrb[0].mxu0 %v699
    %v735 = vpop.f32.mrb[0].mxu0
    %v736 = vadd.f32 0.0, %v735
    %v737 = vpop.f32.mrb[0].mxu0
    %v738 = vadd.f32 0.0, %v737
    %v739 = vpop.f32.mrb[0].mxu0
    %v740 = vpop.f32.mrb[0].mxu0
    %741 = vdwg.mxu0
    %v744 = vrot.slane %v736, 6
    %v745 = vrot.slane %v738, 6
    %v748 = vadd.f32 %v695, %v744
    %v749 = vadd.f32 %v696, %v745
    %v750 = vxor.u32 %v748, 2147483648
    %v751 = vmul.f32 %v750, 1.442695
    %v752 = vpow.pop %v751
    %v753 = vadd.f32 %v752, 1.0
    %v754 = vrcp.pop %v753
    %v755 = vmul.f32 1.0, %v754
    %v756 = vxor.u32 %v749, 2147483648
    %v757 = vmul.f32 %v756, 1.442695
    %v758 = vpow.pop %v757
    %v759 = vadd.f32 %v758, 1.0
    %v760 = vrcp.pop %v759
    %v761 = vmul.f32 1.0, %v760
    %v762 = vtanh.pop %v749
    %v764 = vrot.slane %v687, 6
    %765 = vrot.lane.b32.xlu0 %v764, 64
    %v766 = vpop.permute.xlu0 %765
    %v768 = vmul.f32 %v755, %v766
    %v769 = vmul.f32 %v755, %v762
    %771 = vrot.lane.b32.xlu0 %v769, 64
    %v772 = vpop.permute.xlu0 %771
    %v774 = vadd.f32 %v768, %v772
    %v775 = vtanh.pop %v774
    %v776 = vmul.f32 %v761, %v775
    %v778 = vrot.slane %v776, 2
    %779 = vrot.lane.b32.xlu0 %v778, 64
    %v780 = vpop.permute.xlu0 %779
    %v782 = vsel %vm179, %v780, %v682
    %v784 = vrot.slane %v774, 2
    %785 = vrot.lane.b32.xlu0 %v784, 64
    %v786 = vpop.permute.xlu0 %785
    %v788 = vsel %vm179, %v786, %v687
    %v789 = vsel %vm171, %v780, 0.0
    %790 = vst.msk [vmem:[#allocation3 + $0xa] sm:$0x3] %vm308, %v789
    %791 = vst.msk [vmem:[#allocation3 + $0x4] sm:$0x3] %vm310, %v782
    %v792 = vld [vmem:[#allocation2 + $0x10] sm:$0x30]
    %v793 = vld [vmem:[#allocation2 + $0x18] sm:$0x30]
    %v794 = vpack.c.bf16 %v782, %v782
    %v796 = vsel %vm224, %v794, 0
    %798 = vmatprep.subr.bf16.mxu0 %v209
    %799 = vmatpush1.bf16.msra.mxu0 %v208
    %800 = vmatprep.subr.bf16.mxu0 %v211
    %801 = vmatpush1.bf16.msra.mxu0 %v210
    %802 = vmatprep.subr.bf16.mxu0 %v213
    %803 = vmatpush1.bf16.msra.mxu0 %v212
    %804 = vmatprep.subr.bf16.mxu0 %v215
    %805 = vmatpush1.bf16.msra.mxu0 %v214
    %806 = vmatprep.subr.bf16.mxu0 0
    %807 = vmatpush1.bf16.msra.mxu0 0
    %808 = vmatprep.subr.bf16.mxu0 0
    %809 = vmatpush1.bf16.msra.mxu0 0
    %810 = vmatprep.subr.bf16.mxu0 0
    %811 = vmatpush1.bf16.msra.mxu0 0
    %812 = vmatprep.subr.bf16.mxu0 0
    %813 = vmatpush1.bf16.msra.mxu0 0
    %814 = vmatprep.subr.bf16.mxu0 0
    %815 = vmatpush1.bf16.msra.mxu0 0
    %816 = vmatprep.subr.bf16.mxu0 0
    %817 = vmatpush1.bf16.msra.mxu0 0
    %818 = vmatprep.subr.bf16.mxu0 0
    %819 = vmatpush1.bf16.msra.mxu0 0
    %820 = vmatprep.subr.bf16.mxu0 0
    %821 = vmatpush1.bf16.msra.mxu0 0
    %822 = vmatprep.subr.bf16.mxu0 0
    %823 = vmatpush1.bf16.msra.mxu0 0
    %824 = vmatprep.subr.bf16.mxu0 0
    %825 = vmatpush1.bf16.msra.mxu0 0
    %826 = vmatprep.subr.bf16.mxu0 0
    %827 = vmatpush1.bf16.msra.mxu0 0
    %828 = vmatprep.subr.bf16.mxu0 0
    %829 = vmatpush1.bf16.msra.mxu0 0
    %830 = vmatprep.mubr.bf16.mxu0 0
    %831 = vmatmul.mubr.bf16.gmra.mrb[0].mxu0 %v796
    %v832 = vpop.f32.mrb[0].mxu0
    %v833 = vadd.f32 0.0, %v832
    %v834 = vpop.f32.mrb[0].mxu0
    %v835 = vadd.f32 0.0, %v834
    %v836 = vpop.f32.mrb[0].mxu0
    %v837 = vpop.f32.mrb[0].mxu0
    %838 = vdwg.mxu0
    %v841 = vrot.slane %v833, 4
    %v842 = vrot.slane %v835, 4
    %v845 = vadd.f32 %v792, %v841
    %v846 = vadd.f32 %v793, %v842
    %v847 = vxor.u32 %v845, 2147483648
    %v848 = vmul.f32 %v847, 1.442695
    %v849 = vpow.pop %v848
    %v850 = vadd.f32 %v849, 1.0
    %v851 = vrcp.pop %v850
    %v852 = vmul.f32 1.0, %v851
    %v853 = vxor.u32 %v846, 2147483648
    %v854 = vmul.f32 %v853, 1.442695
    %v855 = vpow.pop %v854
    %v856 = vadd.f32 %v855, 1.0
    %v857 = vrcp.pop %v856
    %v858 = vmul.f32 1.0, %v857
    %v859 = vtanh.pop %v846
    %v861 = vrot.slane %v788, 4
    %862 = vrot.lane.b32.xlu0 %v861, 64
    %v863 = vpop.permute.xlu0 %862
    %v865 = vmul.f32 %v852, %v863
    %v866 = vmul.f32 %v852, %v859
    %868 = vrot.lane.b32.xlu0 %v866, 64
    %v869 = vpop.permute.xlu0 %868
    %v871 = vadd.f32 %v865, %v869
    %v872 = vtanh.pop %v871
    %v873 = vmul.f32 %v858, %v872
    %v875 = vrot.slane %v873, 4
    %876 = vrot.lane.b32.xlu0 %v875, 64
    %v877 = vpop.permute.xlu0 %876
    %v879 = vsel %vm180, %v877, %v782
    %v881 = vrot.slane %v871, 4
    %882 = vrot.lane.b32.xlu0 %v881, 64
    %v883 = vpop.permute.xlu0 %882
    %v885 = vsel %vm180, %v883, %v788
    %v886 = vsel %vm172, %v877, 0.0
    %887 = vst.msk [vmem:[#allocation3 + $0xc] sm:$0x3] %vm308, %v886
    %888 = vst.msk [vmem:[#allocation3 + $0x2] sm:$0x3] %vm310, %v879
    %v889 = vld [vmem:[#allocation2 + $0x10] sm:$0xc0]
    %v890 = vld [vmem:[#allocation2 + $0x18] sm:$0xc0]
    %v891 = vpack.c.bf16 %v879, %v879
    %v893 = vsel %vm224, %v891, 0
    %895 = vmatprep.subr.bf16.mxu0 %v209
    %896 = vmatpush1.bf16.msra.mxu0 %v208
    %897 = vmatprep.subr.bf16.mxu0 %v211
    %898 = vmatpush1.bf16.msra.mxu0 %v210
    %899 = vmatprep.subr.bf16.mxu0 %v213
    %900 = vmatpush1.bf16.msra.mxu0 %v212
    %901 = vmatprep.subr.bf16.mxu0 %v215
    %902 = vmatpush1.bf16.msra.mxu0 %v214
    %903 = vmatprep.subr.bf16.mxu0 0
    %904 = vmatpush1.bf16.msra.mxu0 0
    %905 = vmatprep.subr.bf16.mxu0 0
    %906 = vmatpush1.bf16.msra.mxu0 0
    %907 = vmatprep.subr.bf16.mxu0 0
    %908 = vmatpush1.bf16.msra.mxu0 0
    %909 = vmatprep.subr.bf16.mxu0 0
    %910 = vmatpush1.bf16.msra.mxu0 0
    %911 = vmatprep.subr.bf16.mxu0 0
    %912 = vmatpush1.bf16.msra.mxu0 0
    %913 = vmatprep.subr.bf16.mxu0 0
    %914 = vmatpush1.bf16.msra.mxu0 0
    %915 = vmatprep.subr.bf16.mxu0 0
    %916 = vmatpush1.bf16.msra.mxu0 0
    %917 = vmatprep.subr.bf16.mxu0 0
    %918 = vmatpush1.bf16.msra.mxu0 0
    %919 = vmatprep.subr.bf16.mxu0 0
    %920 = vmatpush1.bf16.msra.mxu0 0
    %921 = vmatprep.subr.bf16.mxu0 0
    %922 = vmatpush1.bf16.msra.mxu0 0
    %923 = vmatprep.subr.bf16.mxu0 0
    %924 = vmatpush1.bf16.msra.mxu0 0
    %925 = vmatprep.subr.bf16.mxu0 0
    %926 = vmatpush1.bf16.msra.mxu0 0
    %927 = vmatprep.mubr.bf16.mxu0 0
    %928 = vmatmul.mubr.bf16.gmra.mrb[0].mxu0 %v893
    %v929 = vpop.f32.mrb[0].mxu0
    %v930 = vadd.f32 0.0, %v929
    %v931 = vpop.f32.mrb[0].mxu0
    %v932 = vadd.f32 0.0, %v931
    %v933 = vpop.f32.mrb[0].mxu0
    %v934 = vpop.f32.mrb[0].mxu0
    %935 = vdwg.mxu0
    %v938 = vrot.slane %v930, 2
    %v939 = vrot.slane %v932, 2
    %v942 = vadd.f32 %v889, %v938
    %v943 = vadd.f32 %v890, %v939
    %v944 = vxor.u32 %v942, 2147483648
    %v945 = vmul.f32 %v944, 1.442695
    %v946 = vpow.pop %v945
    %v947 = vadd.f32 %v946, 1.0
    %v948 = vrcp.pop %v947
    %v949 = vmul.f32 1.0, %v948
    %v950 = vxor.u32 %v943, 2147483648
    %v951 = vmul.f32 %v950, 1.442695
    %v952 = vpow.pop %v951
    %v953 = vadd.f32 %v952, 1.0
    %v954 = vrcp.pop %v953
    %v955 = vmul.f32 1.0, %v954
    %v956 = vtanh.pop %v943
    %v958 = vrot.slane %v885, 2
    %959 = vrot.lane.b32.xlu0 %v958, 64
    %v960 = vpop.permute.xlu0 %959
    %v962 = vmul.f32 %v949, %v960
    %v963 = vmul.f32 %v949, %v956
    %965 = vrot.lane.b32.xlu0 %v963, 64
    %v966 = vpop.permute.xlu0 %965
    %v968 = vadd.f32 %v962, %v966
    %v969 = vtanh.pop %v968
    %v970 = vmul.f32 %v955, %v969
    %v972 = vrot.slane %v970, 6
    %973 = vrot.lane.b32.xlu0 %v972, 64
    %v974 = vpop.permute.xlu0 %973
    %v976 = vsel %vm181, %v974, %v879
    %v977 = vsel %vm173, %v974, 0.0
    %978 = vst.msk [vmem:[#allocation3 + $0xe] sm:$0x3] %vm308, %v977
    %979 = vst.msk [vmem:[#allocation3] sm:$0x3] %vm310, %v976
    %v980 = vld [vmem:[%s5] sm:$0xff]
    %v981 = vld [vmem:[%s5 + $0x8] sm:$0xff]
    %v982 = vld [vmem:[%s5 + $0x10] sm:$0xff]
    %v983 = vld [vmem:[%s5 + $0x18] sm:$0xff]
    %v984 = vld [vmem:[%s5 + $0x20] sm:$0xff]
    %v985 = vld [vmem:[%s5 + $0x28] sm:$0xff]
    %v986 = vld [vmem:[%s5 + $0x30] sm:$0xff]
    %v987 = vld [vmem:[%s5 + $0x38] sm:$0xff]
    %v988 = vld [vmem:[%s5 + $0x40] sm:$0x1]
    %v989 = vld [vmem:[#allocation3] sm:$0xff]
    %v990 = vld [vmem:[#allocation3 + $0x8] sm:$0xff]
    %v991 = vlaneseq
    %v992 = vshrl.u32 %v991, 7
    %v993 = vsub.s32 0, %v992
    %v994 = vrot.slane %v988, %v993
    %v996 = vsel %vm224, %v989, 0
    %v999 = vsel %vm224, %v990, 0
    %1001 = vmatprep.subr.mxu0 0.0
    %1002 = vmatpush1.msra.mxu0 %v980
    %1003 = vmatprep.subr.mxu0 0.0
    %1004 = vmatpush1.msra.mxu0 %v981
    %1005 = vmatprep.subr.mxu0 0.0
    %1006 = vmatpush1.msra.mxu0 %v982
    %1007 = vmatprep.subr.mxu0 0.0
    %1008 = vmatpush1.msra.mxu0 %v983
    %1009 = vmatprep.subr.mxu0 0.0
    %1010 = vmatpush1.msra.mxu0 %v984
    %1011 = vmatprep.subr.mxu0 0.0
    %1012 = vmatpush1.msra.mxu0 %v985
    %1013 = vmatprep.subr.mxu0 0.0
    %1014 = vmatpush1.msra.mxu0 %v986
    %1015 = vmatprep.subr.mxu0 0.0
    %1016 = vmatpush1.msra.mxu0 %v987
    %1017 = vmatprep.subr.mxu0 0.0
    %1018 = vmatpush1.msra.mxu0 0.0
    %1019 = vmatprep.subr.mxu0 0.0
    %1020 = vmatpush1.msra.mxu0 0.0
    %1021 = vmatprep.subr.mxu0 0.0
    %1022 = vmatpush1.msra.mxu0 0.0
    %1023 = vmatprep.subr.mxu0 0.0
    %1024 = vmatpush1.msra.mxu0 0.0
    %1025 = vmatprep.subr.mxu0 0.0
    %1026 = vmatpush1.msra.mxu0 0.0
    %1027 = vmatprep.subr.mxu0 0.0
    %1028 = vmatpush1.msra.mxu0 0.0
    %1029 = vmatprep.subr.mxu0 0.0
    %1030 = vmatpush1.msra.mxu0 0.0
    %1031 = vmatprep.subr.mxu0 0.0
    %1032 = vmatpush1.msra.mxu0 0.0
    %1033 = vmatprep.subr.mxu0 0.0
    %1034 = vmatpush1.msra.mxu0 0.0
    %1035 = vmatprep.subr.mxu0 0.0
    %1036 = vmatpush1.msra.mxu0 0.0
    %1037 = vmatprep.subr.mxu0 0.0
    %1038 = vmatpush1.msra.mxu0 0.0
    %1039 = vmatprep.subr.mxu0 0.0
    %1040 = vmatpush1.msra.mxu0 0.0
    %1041 = vmatprep.subr.mxu0 0.0
    %1042 = vmatpush1.msra.mxu0 0.0
    %1043 = vmatprep.subr.mxu0 0.0
    %1044 = vmatpush1.msra.mxu0 0.0
    %1045 = vmatprep.subr.mxu0 0.0
    %1046 = vmatpush1.msra.mxu0 0.0
    %1047 = vmatprep.subr.mxu0 0.0
    %1048 = vmatpush1.msra.mxu0 0.0
    %1049 = vmatprep.subr.mxu0 0.0
    %1050 = vmatpush1.msra.mxu0 0.0
    %1051 = vmatprep.subr.mxu0 0.0
    %1052 = vmatpush1.msra.mxu0 0.0
    %1053 = vmatprep.subr.mxu0 0.0
    %1054 = vmatpush1.msra.mxu0 0.0
    %1055 = vmatprep.subr.mxu0 0.0
    %1056 = vmatpush1.msra.mxu0 0.0
    %1057 = vmatprep.subr.mxu0 0.0
    %1058 = vmatpush1.msra.mxu0 0.0
    %1059 = vmatprep.subr.mxu0 0.0
    %1060 = vmatpush1.msra.mxu0 0.0
    %1061 = vmatprep.subr.mxu0 0.0
    %1062 = vmatpush1.msra.mxu0 0.0
    %1063 = vmatprep.subr.mxu0 0.0
    %1064 = vmatpush1.msra.mxu0 0.0
    %1065 = vmatprep.mubr.f32.mxu0 0.0
    %1066 = vmatmul.mubr.f32.gmra.mrb[0].mxu0 %v996
    %v1067 = vpop.f32.mrb[0].mxu0
    %v1068 = vadd.f32 %v994, %v1067
    %v1069 = vpop.f32.mrb[0].mxu0
    %1070 = vmatprep.mubr.f32.mxu0 0.0
    %1071 = vmatmul.mubr.f32.gmra.mrb[0].mxu0 %v999
    %v1072 = vpop.f32.mrb[0].mxu0
    %v1073 = vadd.f32 %v994, %v1072
    %v1074 = vpop.f32.mrb[0].mxu0
    %1075 = vdwg.mxu0
    %vm1076 = vcmask 64512
    %1077 = vst.msk [vmem:[%s6] sm:$0xff] %vm1076, %v1068
    %1078 = vst.msk [vmem:[%s6 + $0x8] sm:$0xff] %vm1076, %v1073
    // Predicated region
    $region34: #{tpu_custom_call.1} parent=1 // pred_check
      _
    $region35: #{tpu_custom_call.1} parent=1 // pred_check_branch
      %1080 = sbr.rel (0) target = $region37
    $region36: #{tpu_custom_call.1} parent=1 // pred_region
      _
    $region37: #{tpu_custom_call.1} parent=1 // pred_fallthru
      _
    // Predicated region
    $region38: #{tpu_custom_call.1} parent=1 // pred_check
      _
    $region39: #{tpu_custom_call.1} parent=1 // pred_check_branch
      %1082 = sbr.rel (0) target = $region41
    $region40: #{tpu_custom_call.1} parent=1 // pred_region
      _
    $region41: #{tpu_custom_call.1} parent=1 // pred_fallthru
      _
    %1083 = vsyncpa [#allocation5], 1
    %1084 = vsyncpa [#allocation6], 1

</llo_original>
